<compile_context>
chip_gen: v7x
topology: tpu7x:2x2x1
jax: 0.10.0
libtpu: 0.0.40
codegen_flags: <defaults>
</compile_context>

<pallas_src>
import numpy as np
import jax
import jax.numpy as jnp
from jax.experimental import pallas as pl
from jax.experimental.pallas import tpu as pltpu

LANE = 128                       # channel dims padded to the TPU lane width
_VMEM_LIMIT = 48 * 1024 * 1024   # safe on v5e/v6e (128 MiB) and v7x (64 MiB)
# TODO(synk): re-derive per-generation tile sizes / vmem_limit (v6e can go ~100MiB,
# v7x should stay <=48MiB); current bands use only a few MiB so one constant is fine.


def _round_up(x, m):
    return ((x + m - 1) // m) * m


def _pick_tile_rows(h_out):
    """Largest row-tile <= 32 that divides h_out, preferring >= 2 grid steps."""
    for cand in (32, 16, 8, 4, 2, 1):
        if h_out % cand == 0 and h_out // cand >= 2:
            return cand
    return h_out


# ----------------------------------------------------------------------------
# Bilinear x2 upsample (align_corners=True), emitted directly in the layout the
# fused conv kernel wants: (N*(Ho+4), Wo+2, Cp) bf16 with zero halos.
# ----------------------------------------------------------------------------
def _bilinear_matrix(n_in, n_out):
    """A (n_out, n_in): out = A @ in, align_corners=True (PyTorch semantics)."""
    A = np.zeros((n_out, n_in), dtype=np.float32)
    if n_in == 1 or n_out == 1:
        A[:, 0] = 1.0
        return A
    scale = (n_in - 1) / (n_out - 1)
    for i in range(n_out):
        src = i * scale
        i0 = min(int(np.floor(src)), n_in - 1)
        i1 = min(i0 + 1, n_in - 1)
        frac = src - i0
        A[i, i0] += 1.0 - frac
        A[i, i1] += frac
    return A


def bilinear_upsample_x2_to_conv_layout(x_nchw, c_pad):
    """NCHW f32 -> (N*(2H+4), 2W+2, c_pad) bf16 (conv1-ready, halo + channel pad)."""
    N, C, H, W = x_nchw.shape
    Ho, Wo = 2 * H, 2 * W
    Hp, Wp = Ho + 4, Wo + 2

    aw = jnp.asarray(_bilinear_matrix(W, Wo))                        # (Wo, W) f32
    ah = jnp.asarray(_bilinear_matrix(H, Ho), dtype=jnp.bfloat16)    # (Ho, H) bf16

    # Column (W) interpolation + NCHW->NHWC + channel pad on the *small*
    # pre-upsample tensor (XLA). This replaces the former dense kron matrix.
    xw = jnp.einsum("pw,nchw->nhpc", aw, x_nchw)                     # (N, H, Wo, C) f32
    xw = jnp.pad(xw, ((0, 0), (0, 0), (0, 0), (0, c_pad - C)))
    xw = xw.astype(jnp.bfloat16).reshape(N, H, Wo * c_pad)

    def kernel(x_ref, ah_ref, o_ref):
        # Row (H) interpolation on the MXU (bf16 operands, f32 accumulation).
        r = jnp.dot(ah_ref[...], x_ref[0], preferred_element_type=jnp.float32)
        # Single interior store + zero only the halo strips (each byte stored once).
        o_ref[0, 2:Ho + 2, c_pad:(Wo + 1) * c_pad] = r.astype(jnp.bfloat16)
        z_rows = jnp.zeros((2, Wp * c_pad), jnp.bfloat16)
        z_col = jnp.zeros((Ho, c_pad), jnp.bfloat16)
        o_ref[0, 0:2, :] = z_rows
        o_ref[0, Ho + 2:Ho + 4, :] = z_rows
        o_ref[0, 2:Ho + 2, 0:c_pad] = z_col
        o_ref[0, 2:Ho + 2, (Wo + 1) * c_pad:] = z_col

    # TODO(synk): row-tile this kernel too for the largest (224x224) decoder stage.
    out = pl.pallas_call(
        kernel,
        out_shape=jax.ShapeDtypeStruct((N, Hp, Wp * c_pad), jnp.bfloat16),
        grid=(N,),
        in_specs=[pl.BlockSpec((1, H, Wo * c_pad), lambda n: (n, 0, 0)),
                  pl.BlockSpec((Ho, H), lambda n: (0, 0))],
        out_specs=pl.BlockSpec((1, Hp, Wp * c_pad), lambda n: (n, 0, 0)),
        compiler_params=pltpu.CompilerParams(
            dimension_semantics=("parallel",),
            vmem_limit_bytes=_VMEM_LIMIT),
    )(xw, ah)
    return out.reshape(N * Hp, Wp, c_pad)


# ----------------------------------------------------------------------------
# Fused [3x3 conv + BN + ReLU] x 2, tiled over (batch, output-row bands).
# Input halos come from manual double-buffered DMA; conv1's result stays in VMEM.
# ----------------------------------------------------------------------------
def fused_conv_block(xu_flat, skip_flat, kp, N, Ho, Wo, out_dtype=jnp.bfloat16):
    cpx, cop = kp["cpx"], kp["cop"]
    has_skip = skip_flat is not None
    cps = kp["cps"] if has_skip else 0
    Hp, Wp = Ho + 4, Wo + 2
    TR = _pick_tile_rows(Ho)          # conv2 output rows per grid step
    nT = Ho // TR
    R1 = TR + 2                       # conv1 rows needed per step (incl. conv2 halo)
    BR = TR + 4                       # input rows needed per step (incl. conv1 halo)

    def kernel(*refs):
        idx = 0
        xu_hbm = refs[idx]; idx += 1
        sk_hbm = None
        if has_skip:
            sk_hbm = refs[idx]; idx += 1
        w1x_ref = refs[idx]; idx += 1
        w1s_ref = None
        if has_skip:
            w1s_ref = refs[idx]; idx += 1
        w2_ref, s1_ref, b1_ref, s2_ref, b2_ref, o_ref = refs[idx:idx + 6]
        idx += 6
        xbuf = refs[idx]; idx += 1
        sbuf = None
        if has_skip:
            sbuf = refs[idx]; idx += 1
        h1buf = refs[idx]
        dsem = refs[idx + 1]

        n = pl.program_id(0)
        t = pl.program_id(1)
        slot = t % 2

        def copies(tt, sl):
            r0 = n * Hp + tt * TR
            out = [pltpu.make_async_copy(xu_hbm.at[pl.ds(r0, BR)],
                                         xbuf.at[sl], dsem.at[0, sl])]
            if has_skip:
                out.append(pltpu.make_async_copy(sk_hbm.at[pl.ds(r0, BR)],
                                                 sbuf.at[sl], dsem.at[1, sl]))
            return out

        # Prime band 0, prefetch band t+1 into the other slot, wait for band t.
        @pl.when(t == 0)
        def _():
            for c in copies(0, 0):
                c.start()

        @pl.when(t + 1 < nT)
        def _():
            for c in copies(t + 1, 1 - slot):
                c.start()

        for c in copies(t, slot):
            c.wait()

        # conv1: three dy-group matmuls per input (K = 3*Cin_p) accumulated in f32;
        # the full 9-tap im2col concat is never materialised.
        # TODO(synk): on v5e, build the dx taps with pltpu.roll (XLU) instead of
        # sublane-offset slices to keep the single vst slot free.
        def accumulate(buf, w_ref, cin_p, rows, acc):
            band = buf[slot]                                    # (BR, Wp, cin_p) bf16
            for dy in range(3):
                xd = band[dy:dy + rows]                         # (rows, Wp, cin_p)
                taps = [xd[:, dx:dx + Wo, :].reshape(rows * Wo, cin_p)
                        for dx in range(3)]
                cols = jnp.concatenate(taps, axis=-1)           # (rows*Wo, 3*cin_p)
                wk = w_ref[dy * 3 * cin_p:(dy + 1) * 3 * cin_p, :]
                acc = acc + jnp.dot(cols, wk, preferred_element_type=jnp.float32)
            return acc

        acc = jnp.zeros((R1 * Wo, cop), jnp.float32)
        acc = accumulate(xbuf, w1x_ref, cpx, R1, acc)
        if has_skip:                                            # virtual channel concat
            acc = accumulate(sbuf, w1s_ref, cps, R1, acc)

        y1 = jnp.maximum(acc * s1_ref[...] + b1_ref[...], 0.0)  # folded BN + ReLU (f32)
        y1 = y1.reshape(R1, Wo, cop).astype(jnp.bfloat16)

        # conv1 result stays in VMEM with its zero halo (no HBM round trip).
        h1buf[:, 1:Wo + 1, :] = y1
        zcol = jnp.zeros((R1, 1, cop), jnp.bfloat16)
        h1buf[:, 0:1, :] = zcol
        h1buf[:, Wo + 1:Wo + 2, :] = zcol

        @pl.when(t == 0)                    # global top halo row of conv1's output
        def _():
            h1buf[0:1] = jnp.zeros((1, Wp, cop), jnp.bfloat16)

        @pl.when(t == nT - 1)               # global bottom halo row
        def _():
            h1buf[R1 - 1:R1] = jnp.zeros((1, Wp, cop), jnp.bfloat16)

        # conv2 on the VMEM band, same dy-group structure.
        h1 = h1buf[...]
        acc2 = jnp.zeros((TR * Wo, cop), jnp.float32)
        for dy in range(3):
            hd = h1[dy:dy + TR]
            taps = [hd[:, dx:dx + Wo, :].reshape(TR * Wo, cop) for dx in range(3)]
            cols = jnp.concatenate(taps, axis=-1)
            wk = w2_ref[dy * 3 * cop:(dy + 1) * 3 * cop, :]
            acc2 = acc2 + jnp.dot(cols, wk, preferred_element_type=jnp.float32)

        y2 = jnp.maximum(acc2 * s2_ref[...] + b2_ref[...], 0.0)
        # Single lane-dense store, no halo, bf16 writeback.
        o_ref[0] = y2.reshape(TR, Wo, cop).astype(o_ref.dtype)

    in_specs = [pl.BlockSpec(memory_space=pl.ANY)]
    operands = [xu_flat]
    if has_skip:
        in_specs.append(pl.BlockSpec(memory_space=pl.ANY))
        operands.append(skip_flat)
    in_specs.append(pl.BlockSpec(kp["w1x"].shape, lambda n, t: (0, 0)))
    operands.append(kp["w1x"])
    if has_skip:
        in_specs.append(pl.BlockSpec(kp["w1s"].shape, lambda n, t: (0, 0)))
        operands.append(kp["w1s"])
    for name in ("w2", "s1", "b1", "s2", "b2"):
        in_specs.append(pl.BlockSpec(kp[name].shape, lambda n, t: (0, 0)))
        operands.append(kp[name])

    scratch = [pltpu.VMEM((2, BR, Wp, cpx), jnp.bfloat16)]
    if has_skip:
        scratch.append(pltpu.VMEM((2, BR, Wp, cps), jnp.bfloat16))
    scratch.append(pltpu.VMEM((R1, Wp, cop), jnp.bfloat16))
    scratch.append(pltpu.SemaphoreType.DMA((2, 2)))

    return pl.pallas_call(
        kernel,
        out_shape=jax.ShapeDtypeStruct((N, Ho, Wo, cop), out_dtype),
        grid=(N, nT),
        in_specs=in_specs,
        out_specs=pl.BlockSpec((1, TR, Wo, cop), lambda n, t: (n, t, 0, 0)),
        scratch_shapes=scratch,
        compiler_params=pltpu.CompilerParams(
            # Row bands must stay "arbitrary": the manual prefetch chain runs along t.
            dimension_semantics=("parallel", "arbitrary"),
            vmem_limit_bytes=_VMEM_LIMIT),
    )(*operands)


# ----------------------------------------------------------------------------
# Parameters (deterministic synthetic init) + packing to kernel layout.
# ----------------------------------------------------------------------------
def init_decoder_block_params(key, in_channels, out_channels, skip_channels=0,
                              eps=1e-5):
    c1_in = in_channels + skip_channels
    keys = jax.random.split(key, 10)

    def conv_w(k, cin, cout):
        bound = 1.0 / np.sqrt(cin * 9)
        return jax.random.uniform(k, (cout, cin, 3, 3), jnp.float32, -bound, bound)

    def bn_fold(kg, kb, km, kv, cout):
        # TODO(synk): BatchNorm2d folded as eval-mode affine (running stats);
        # training-mode batch statistics are not computed.
        gamma = 1.0 + 0.1 * jax.random.normal(kg, (cout,), jnp.float32)
        beta = 0.1 * jax.random.normal(kb, (cout,), jnp.float32)
        mean = 0.1 * jax.random.normal(km, (cout,), jnp.float32)
        var = 1.0 + 0.1 * jax.random.uniform(kv, (cout,), jnp.float32)
        scale = gamma / jnp.sqrt(var + eps)
        return scale, beta - mean * scale

    s1, b1 = bn_fold(keys[1], keys[2], keys[3], keys[4], out_channels)
    s2, b2 = bn_fold(keys[6], keys[7], keys[8], keys[9], out_channels)
    return dict(w1=conv_w(keys[0], c1_in, out_channels), s1=s1, b1=b1,
                w2=conv_w(keys[5], out_channels, out_channels), s2=s2, b2=b2)


def _pack_conv_weight(w_oihw, cin_p, cout_p):
    """(Cout, Cin, 3, 3) f32 -> (9*Cin_p, Cout_p) bf16 matching the dy/dx/c order."""
    cout, cin = w_oihw.shape[0], w_oihw.shape[1]
    wk = jnp.transpose(w_oihw, (2, 3, 1, 0)).reshape(9, cin, cout)
    wk = jnp.pad(wk, ((0, 0), (0, cin_p - cin), (0, cout_p - cout)))
    return wk.reshape(9 * cin_p, cout_p).astype(jnp.bfloat16)
    # TODO(synk): for tiny toy channel counts, pack K = round_up(9*Cin, 128) instead
    # of 9*round_up(Cin, 128) to avoid 32x padding inflation (real sizes unaffected).


def _pad_affine(v, cp):
    return jnp.pad(v, (0, cp - v.shape[0])).reshape(1, cp).astype(jnp.float32)


def prepare_kernel_params(raw, in_channels, skip_channels):
    cout = raw["w1"].shape[0]
    cpx = _round_up(in_channels, LANE)
    cop = _round_up(cout, LANE)
    kp = dict(
        cout=cout, cpx=cpx, cop=cop,
        w1x=_pack_conv_weight(raw["w1"][:, :in_channels], cpx, cop),
        s1=_pad_affine(raw["s1"], cop), b1=_pad_affine(raw["b1"], cop),
        w2=_pack_conv_weight(raw["w2"], cop, cop),
        s2=_pad_affine(raw["s2"], cop), b2=_pad_affine(raw["b2"], cop),
    )
    if skip_channels:
        cps = _round_up(skip_channels, LANE)
        kp["cps"] = cps
        kp["w1s"] = _pack_conv_weight(raw["w1"][:, in_channels:], cps, cop)
    return kp


# ----------------------------------------------------------------------------
# DecoderBlock forward (NCHW in, NCHW out).
# ----------------------------------------------------------------------------
def decoder_block_forward(kparams, x_nchw, skip_nchw=None):
    N, _, H, W = x_nchw.shape
    Ho, Wo = 2 * H, 2 * W
    Hp, Wp = Ho + 4, Wo + 2

    # Upsample kernel emits the conv1-ready layout (halo + channel pad, bf16).
    xu = bilinear_upsample_x2_to_conv_layout(x_nchw, kparams["cpx"])

    skip_flat = None
    if skip_nchw is not None:
        cs = skip_nchw.shape[1]
        # TODO(synk): fold this transpose/pad/cast of the (largest) skip activation
        # into the conv kernel's DMA path instead of a wrapper-side XLA pass.
        sk = jnp.transpose(skip_nchw, (0, 2, 3, 1))
        sk = jnp.pad(sk, ((0, 0), (2, 2), (1, 1), (0, kparams["cps"] - cs)))
        skip_flat = sk.astype(jnp.bfloat16).reshape(N * Hp, Wp, kparams["cps"])

    h2 = fused_conv_block(xu, skip_flat, kparams, N, Ho, Wo)   # (N, Ho, Wo, cop) bf16
    return jnp.transpose(h2[..., :kparams["cout"]], (0, 3, 1, 2)).astype(jnp.float32)


# ----------------------------------------------------------------------------
# Pure-JAX f32 reference for the sanity check.
# ----------------------------------------------------------------------------
def _reference(raw, x, skip):
    N, C, H, W = x.shape
    ah = jnp.asarray(_bilinear_matrix(H, 2 * H))
    aw = jnp.asarray(_bilinear_matrix(W, 2 * W))
    xu = jnp.einsum("oh,nchw,pw->ncop", ah, x, aw)
    y = jnp.transpose(xu, (0, 2, 3, 1))
    if skip is not None:
        y = jnp.concatenate([y, jnp.transpose(skip, (0, 2, 3, 1))], axis=-1)

    def cbr(y, w, s, b):
        whwio = jnp.transpose(w, (2, 3, 1, 0))
        z = jax.lax.conv_general_dilated(
            y, whwio, (1, 1), "SAME", dimension_numbers=("NHWC", "HWIO", "NHWC"))
        return jnp.maximum(z * s + b, 0.0)

    y = cbr(y, raw["w1"], raw["s1"], raw["b1"])
    y = cbr(y, raw["w2"], raw["s2"], raw["b2"])
    return jnp.transpose(y, (0, 3, 1, 2))


if __name__ == "__main__":
    key = jax.random.PRNGKey(0)
    kx, ks, kp1, kp2 = jax.random.split(key, 4)

    N, C_in, H, W = 2, 4, 16, 16     # x: low-res feature map
    C_skip, C_out = 4, 8             # skip connection at 2x resolution

    x = jax.random.normal(kx, (N, C_in, H, W), jnp.float32)
    skip = jax.random.normal(ks, (N, C_skip, 2 * H, 2 * W), jnp.float32)

    # --- with skip connection ---
    raw = init_decoder_block_params(kp1, C_in, C_out, skip_channels=C_skip)
    kparams = prepare_kernel_params(raw, C_in, C_skip)
    out = jax.block_until_ready(decoder_block_forward(kparams, x, skip))
    assert out.shape == (N, C_out, 2 * H, 2 * W), out.shape
    ref = _reference(raw, x, skip)
    # Tolerance reflects bf16 matmul operands / intermediates (f32 accumulation)
    # vs the f32 reference.
    np.testing.assert_allclose(np.asarray(out), np.asarray(ref),
                               atol=4e-2, rtol=4e-2)

    # --- without skip connection ---
    raw0 = init_decoder_block_params(kp2, C_in, C_out, skip_channels=0)
    kparams0 = prepare_kernel_params(raw0, C_in, 0)
    out0 = jax.block_until_ready(decoder_block_forward(kparams0, x, None))
    assert out0.shape == (N, C_out, 2 * H, 2 * W), out0.shape
    ref0 = _reference(raw0, x, None)
    np.testing.assert_allclose(np.asarray(out0), np.asarray(ref0),
                               atol=4e-2, rtol=4e-2)

    print("KERNEL_OK")
</pallas_src>

<mosaic_0001>
module attributes {stable_mosaic.version = 11 : i64} {
  func.func @kernel(%arg0: i32, %arg1: memref<1x16x4096xbf16, #tpu.memory_space<vmem>>, %arg2: memref<32x16xbf16, #tpu.memory_space<vmem>>, %arg3: memref<1x36x4352xbf16, #tpu.memory_space<vmem>>) attributes {dimension_semantics = [#tpu.dimension_semantics<parallel>], iteration_bounds = array<i64: 2>, scalar_prefetch = 0 : i64, scratch_operands = 0 : i64, tpu.core_type = #tpu.core_type<tc>, window_params = [{transform_indices = @transform_0, window_bounds = array<i64: 1, 16, 4096>}, {pipeline_mode = #tpu.pipeline_mode<synchronous>, transform_indices = @transform_1, window_bounds = array<i64: 32, 16>}, {transform_indices = @transform_2, window_bounds = array<i64: 1, 36, 4352>}]} {
    %c0 = arith.constant 0 : index
    %c0_0 = arith.constant 0 : index
    %0 = vector.load %arg2[%c0, %c0_0] : memref<32x16xbf16, #tpu.memory_space<vmem>>, vector<32x16xbf16>
    %c0_1 = arith.constant 0 : index
    %c0_2 = arith.constant 0 : index
    %c0_3 = arith.constant 0 : index
    %1 = vector.load %arg1[%c0_1, %c0_2, %c0_3] : memref<1x16x4096xbf16, #tpu.memory_space<vmem>>, vector<1x16x4096xbf16>
    %2 = vector.shape_cast %1 : vector<1x16x4096xbf16> to vector<16x4096xbf16>
    %cst = arith.constant dense<0.000000e+00> : vector<32x4096xf32>
    %3 = tpu.matmul %0, %2, %cst {dimension_numbers = #tpu.dot_dimension_numbers<[1], [0], [0], [1], [0, 0, 1, 1], [], []>} : vector<32x16xbf16>, vector<16x4096xbf16>, vector<32x4096xf32> -> vector<32x4096xf32>
    %4 = arith.truncf %3 : vector<32x4096xf32> to vector<32x4096xbf16>
    %c0_4 = arith.constant 0 : index
    %c2 = arith.constant 2 : index
    %c128 = arith.constant 128 : index
    %5 = vector.load %arg3[%c0_4, %c2, %c128] : memref<1x36x4352xbf16, #tpu.memory_space<vmem>>, vector<1x32x4096xbf16>
    %6 = vector.shape_cast %5 : vector<1x32x4096xbf16> to vector<32x4096xbf16>
    %7 = vector.shape_cast %4 : vector<32x4096xbf16> to vector<1x32x4096xbf16>
    tpu.vector_store %arg3[%c0_4, %c2, %c128], %7 {strides = array<i32>} : memref<1x36x4352xbf16, #tpu.memory_space<vmem>>, vector<1x32x4096xbf16>,
    %cst_5 = arith.constant 0.000000e+00 : bf16
    %8 = vector.broadcast %cst_5 : bf16 to vector<2x4352xbf16>
    %cst_6 = arith.constant 0.000000e+00 : bf16
    %9 = vector.broadcast %cst_6 : bf16 to vector<32x128xbf16>
    %c0_7 = arith.constant 0 : index
    %c0_8 = arith.constant 0 : index
    %c0_9 = arith.constant 0 : index
    %10 = vector.load %arg3[%c0_7, %c0_8, %c0_9] : memref<1x36x4352xbf16, #tpu.memory_space<vmem>>, vector<1x2x4352xbf16>
    %11 = vector.shape_cast %10 : vector<1x2x4352xbf16> to vector<2x4352xbf16>
    %12 = vector.shape_cast %8 : vector<2x4352xbf16> to vector<1x2x4352xbf16>
    tpu.vector_store %arg3[%c0_7, %c0_8, %c0_9], %12 {strides = array<i32>} : memref<1x36x4352xbf16, #tpu.memory_space<vmem>>, vector<1x2x4352xbf16>,
    %c0_10 = arith.constant 0 : index
    %c34 = arith.constant 34 : index
    %c0_11 = arith.constant 0 : index
    %13 = vector.load %arg3[%c0_10, %c34, %c0_11] : memref<1x36x4352xbf16, #tpu.memory_space<vmem>>, vector<1x2x4352xbf16>
    %14 = vector.shape_cast %13 : vector<1x2x4352xbf16> to vector<2x4352xbf16>
    %15 = vector.shape_cast %8 : vector<2x4352xbf16> to vector<1x2x4352xbf16>
    tpu.vector_store %arg3[%c0_10, %c34, %c0_11], %15 {strides = array<i32>} : memref<1x36x4352xbf16, #tpu.memory_space<vmem>>, vector<1x2x4352xbf16>,
    %c0_12 = arith.constant 0 : index
    %c2_13 = arith.constant 2 : index
    %c0_14 = arith.constant 0 : index
    %16 = vector.load %arg3[%c0_12, %c2_13, %c0_14] : memref<1x36x4352xbf16, #tpu.memory_space<vmem>>, vector<1x32x128xbf16>
    %17 = vector.shape_cast %16 : vector<1x32x128xbf16> to vector<32x128xbf16>
    %18 = vector.shape_cast %9 : vector<32x128xbf16> to vector<1x32x128xbf16>
    tpu.vector_store %arg3[%c0_12, %c2_13, %c0_14], %18 {strides = array<i32>} : memref<1x36x4352xbf16, #tpu.memory_space<vmem>>, vector<1x32x128xbf16>,
    %c0_15 = arith.constant 0 : index
    %c2_16 = arith.constant 2 : index
    %c4224 = arith.constant 4224 : index
    %19 = vector.load %arg3[%c0_15, %c2_16, %c4224] : memref<1x36x4352xbf16, #tpu.memory_space<vmem>>, vector<1x32x128xbf16>
    %20 = vector.shape_cast %19 : vector<1x32x128xbf16> to vector<32x128xbf16>
    %21 = vector.shape_cast %9 : vector<32x128xbf16> to vector<1x32x128xbf16>
    tpu.vector_store %arg3[%c0_15, %c2_16, %c4224], %21 {strides = array<i32>} : memref<1x36x4352xbf16, #tpu.memory_space<vmem>>, vector<1x32x128xbf16>,
    return
  }
  func.func @transform_0(%arg0: i32) -> (i32, i32, i32) {
    %c0_i32 = arith.constant 0 : i32
    %c0_i32_0 = arith.constant 0 : i32
    %c0_i32_1 = arith.constant 0 : i32
    return %arg0, %c0_i32, %c0_i32_0 : i32, i32, i32
  }
  func.func @transform_1(%arg0: i32) -> (i32, i32) {
    %c0_i32 = arith.constant 0 : i32
    %c0_i32_0 = arith.constant 0 : i32
    %c0_i32_1 = arith.constant 0 : i32
    return %c0_i32, %c0_i32_0 : i32, i32
  }
  func.func @transform_2(%arg0: i32) -> (i32, i32, i32) {
    %c0_i32 = arith.constant 0 : i32
    %c0_i32_0 = arith.constant 0 : i32
    %c0_i32_1 = arith.constant 0 : i32
    return %arg0, %c0_i32, %c0_i32_0 : i32, i32, i32
  }
}

</mosaic_0001>

<llo_original>
// kernel: tpu_custom_call.1
$region0: #{tpu_custom_call.1}
  #allocation0 [shape = 'u32[]', space=smem, size = 0x4, offset = 0x4, fixed_abs, tag = 'smem constant byte address 0x4 - core index']
  #allocation1 [shape = 'u32[144,128]{1,0:T(1,128)}', space=vmem, size = 0x12000, scoped, tag = 'internal scratch']
  %s0 = inlined_call_operand.hbm [shape: bf16[2,16,4096], index: 0, kind: input, shape index: {}]
  %s1 = inlined_call_operand.vmem [shape: bf16[32,16], index: 1, kind: input, shape index: {}]
  %s2 = inlined_call_operand.vmem [shape: bf16[2,36,4352], index: 2, kind: output, shape index: {}]
  %s3 = sld [smem:[#allocation0]]
  $region45: #{tpu_custom_call.1} parent=0
    _
  %s5 = ssub.s32 1, %s3
  %s6 = scalar_select 0, %s5, %s3
  $region1: #{tpu_custom_call.1} parent=0
    #allocation2 [shape = 'u8[262144]{0}', space=vmem, size = 0x40000, scoped, tag = 'input window, operand 0']
    #allocation3 [shape = 's32[2]{0}', space=sflag, size = 0x8, scoped, tag = 'scoped memory for tpu_custom_call.1']
    %7 = vsyncpa [#allocation3], 0
    %s8 = scalar_lea.sflag [#allocation3], 1
    %9 = vsyncpa %s8, 0
    loop: start=0, step=1, limit=4
    $region2: #{tpu_custom_call.1} parent=1 // loop_pre_header
      _
    $region3: #{tpu_custom_call.1} parent=1 // loop_header
      %s11 = sphi 0, %s15
      %p12 = scmp.ge.s32.totalorder %s11, 4
      %s21 = sphi 0, %s23
      %s24 = sphi 0, %s21
      %s25 = sphi 0, %s24
      %s41 = sphi 0, %s25
      %s45 = sphi 0, %s45
      %s47 = sphi 0, %s45
      %s48 = sphi 0, %s47
      %s62 = sphi 0, %s48
      %s68 = sphi 0, %s70
      %s71 = sphi 0, %s68
      %s72 = sphi 0, %s71
      %s88 = sphi 0, %s72
    $region4: #{tpu_custom_call.1} parent=1 // loop_header_branch
      %14 = sbr.rel (%p12) target = $region8
    $region5: #{tpu_custom_call.1} parent=1 // loop_body
      %s16 = ssub.s32 %s11, 1
      %s17 = ssub.s32 %s11, 2
      %s18 = sadd.s32 %s11, 1
      %s19 = ssub.s32 %s11, %s18
      %p20 = scmp.eq.s32.totalorder %s19, 0
      %s22 = sadd.s32 %s21, 1
      %s23 = scalar_select %p20, %s21, %s22
      %p26 = pneg %p20
      %p27 = scmp.eq.s32.totalorder %s11, 1
      %p28 = por %p26, %p27
      %p29 = scmp.ne.s32.totalorder %s21, %s24
      %p30 = scmp.eq.s32.totalorder %s11, 0
      %p31 = por %p29, %p30
      %p32 = scmp.ne.s32.totalorder %s21, %s24
      %p33 = scmp.eq.s32.totalorder %s16, 1
      %p34 = por %p32, %p33
      %p35 = scmp.ne.s32.totalorder %s24, %s25
      %p36 = scmp.eq.s32.totalorder %s16, 0
      %p37 = por %p35, %p36
      %p38 = scmp.ne.s32.totalorder %s24, %s25
      %p39 = scmp.eq.s32.totalorder %s17, 1
      %p40 = por %p38, %p39
      %p42 = scmp.ne.s32.totalorder %s25, %s41
      %p43 = scmp.eq.s32.totalorder %s17, 0
      %p44 = por %p42, %p43
      %s46 = sadd.s32 %s45, 1
      %p49 = scmp.eq.s32.totalorder %s11, 1
      %p50 = scmp.ne.s32.totalorder %s45, %s47
      %p51 = scmp.eq.s32.totalorder %s11, 0
      %p52 = por %p50, %p51
      %p53 = scmp.ne.s32.totalorder %s45, %s47
      %p54 = scmp.eq.s32.totalorder %s16, 1
      %p55 = por %p53, %p54
      %p56 = scmp.ne.s32.totalorder %s47, %s48
      %p57 = scmp.eq.s32.totalorder %s16, 0
      %p58 = por %p56, %p57
      %p59 = scmp.ne.s32.totalorder %s47, %s48
      %p60 = scmp.eq.s32.totalorder %s17, 1
      %p61 = por %p59, %p60
      %p63 = scmp.ne.s32.totalorder %s48, %s62
      %p64 = scmp.eq.s32.totalorder %s17, 0
      %p65 = por %p63, %p64
      %s66 = ssub.s32 %s11, %s18
      %p67 = scmp.eq.s32.totalorder %s66, 0
      %s69 = sadd.s32 %s68, 1
      %s70 = scalar_select %p67, %s68, %s69
      %p73 = pneg %p67
      %p74 = scmp.eq.s32.totalorder %s11, 1
      %p75 = por %p73, %p74
      %p76 = scmp.ne.s32.totalorder %s68, %s71
      %p77 = scmp.eq.s32.totalorder %s11, 0
      %p78 = por %p76, %p77
      %p79 = scmp.ne.s32.totalorder %s68, %s71
      %p80 = scmp.eq.s32.totalorder %s16, 1
      %p81 = por %p79, %p80
      %p82 = scmp.ne.s32.totalorder %s71, %s72
      %p83 = scmp.eq.s32.totalorder %s16, 0
      %p84 = por %p82, %p83
      %p85 = scmp.ne.s32.totalorder %s71, %s72
      %p86 = scmp.eq.s32.totalorder %s17, 1
      %p87 = por %p85, %p86
      %p89 = scmp.ne.s32.totalorder %s72, %s88
      %p90 = scmp.eq.s32.totalorder %s17, 0
      %p91 = por %p89, %p90
      %p92 = scmp.le.s32.totalorder 1, %s11
      %p93 = scmp.lt.s32.totalorder %s11, 3
      %p94 = pnand %p92, %p93
      %p95 = pneg %p94
      // Predicated region
      $region9: #{tpu_custom_call.1} parent=5 // pred_check
        _
      $region10: #{tpu_custom_call.1} parent=5 // pred_check_branch
        %97 = sbr.rel (%p94) target = $region12
      $region11: #{tpu_custom_call.1} parent=5 // pred_region
        %s98 = ssub.s32 %s11, 1
        // Predicated region
        $region13: #{tpu_custom_call.1} parent=11 // pred_check
          %p99 = pneg %p58
        $region14: #{tpu_custom_call.1} parent=11 // pred_check_branch
          %101 = sbr.rel (%p99) target = $region16
        $region15: #{tpu_custom_call.1} parent=11 // pred_region
          _
        $region16: #{tpu_custom_call.1} parent=11 // pred_fallthru
          _
      $region12: #{tpu_custom_call.1} parent=5 // pred_fallthru
        _
      %p102 = scmp.lt.s32.totalorder %s11, 2
      // Predicated region
      $region17: #{tpu_custom_call.1} parent=5 // pred_check
        %p103 = pneg %p102
      $region18: #{tpu_custom_call.1} parent=5 // pred_check_branch
        %105 = sbr.rel (%p103) target = $region20
      $region19: #{tpu_custom_call.1} parent=5 // pred_region
        // Predicated region
        $region21: #{tpu_custom_call.1} parent=19 // pred_check
          %p106 = pneg %p31
        $region22: #{tpu_custom_call.1} parent=19 // pred_check_branch
          %108 = sbr.rel (%p106) target = $region24
        $region23: #{tpu_custom_call.1} parent=19 // pred_region
          %s109 = sand.u32 %s21, 1
          %s110 = scalar_lea.sflag [#allocation3], %s109
          %s111 = sand.u32 %s21, 1
          %s112 = smul.addr %s111, 256
          %s113 = scalar_lea.vmem [#allocation2], %s112
          %s115 = ssub.s32 4096, 4096
          %116 = vsyncadd %s110, %s115
          %s117 = smul.addr %s11, 64
          %s118 = smul.addr %s117, 64
          %s119 = scalar_lea.hbm %s0, %s118
          %s120 = sshll.u32 %s113, 4
          %s121 = int_to_ptr.vmem [resolvable:$true] %s120
          %126 = dma.hbm_to_vmem [thread:$0]  %s119, 4096, %s121, %s110, 2048, 2048, 128
        $region24: #{tpu_custom_call.1} parent=19 // pred_fallthru
          _
      $region20: #{tpu_custom_call.1} parent=5 // pred_fallthru
        _
      %p127 = scmp.le.s32.totalorder 1, %s11
      %p128 = scmp.lt.s32.totalorder %s11, 3
      %p129 = pnand %p127, %p128
      %p130 = pneg %p129
      // Predicated region
      $region25: #{tpu_custom_call.1} parent=5 // pred_check
        _
      $region26: #{tpu_custom_call.1} parent=5 // pred_check_branch
        %132 = sbr.rel (%p129) target = $region28
      $region27: #{tpu_custom_call.1} parent=5 // pred_region
        %s133 = ssub.s32 %s11, 1
        %s134 = sand.u32 %s24, 1
        %s135 = scalar_lea.sflag [#allocation3], %s134
        %s136 = sand.u32 %s24, 1
        %s137 = smul.addr %s136, 256
        %s138 = scalar_lea.vmem [#allocation2], %s137
        // Predicated region
        $region29: #{tpu_custom_call.1} parent=27 // pred_check
          %p139 = pneg %p37
        $region30: #{tpu_custom_call.1} parent=27 // pred_check_branch
          %141 = sbr.rel (%p139) target = $region32
        $region31: #{tpu_custom_call.1} parent=27 // pred_region
          %142 = dma.done %s135, 4096
        $region32: #{tpu_custom_call.1} parent=27 // pred_fallthru
          _
        %s143 = sand.u32 %s24, 1
        %s144 = scalar_lea.sflag [#allocation3], %s143
        %s145 = sand.u32 %s24, 1
        %s146 = smul.addr %s145, 256
        %s147 = scalar_lea.vmem [#allocation2], %s146
        %p148 = pneg %p37
        %p149 = pneg %p34
        %p150 = pneg %p58
        %p151 = pneg %p55
        %p152 = pneg %p84
        %p153 = pneg %p81
        %p154 = scmp.lt.s32.totalorder %s16, 1
        %s155 = scalar_select %p154, %s16, 1
        %s156 = smul.addr %s155, 170
        %s157 = smul.addr %s156, 4
        %s158 = scalar_lea.vmem %s2, %s157
        %p159 = scmp.lt.s32.totalorder %s16, 1
        %s160 = scalar_select %p159, %s16, 1
        %s161 = smul.addr %s160, 170
        %s162 = smul.addr %s161, 4
        %s163 = scalar_lea.vmem %s2, %s162
        %v165 = vld [vmem:[%s1] sm:$0xf]
        %v166 = vld [vmem:[%s1 + $0x4] sm:$0xf]
        %v167 = vld [vmem:[%s1 + $0x8] sm:$0xf]
        %v168 = vld [vmem:[%s1 + $0xc] sm:$0xf]
        %v169 = vld [vmem:[%s138] sm:$0xff]
        %v170 = vld [vmem:[%s138 + $0x8] sm:$0xff]
        %v171 = vld [vmem:[%s138 + $0x10] sm:$0xff]
        %v172 = vld [vmem:[%s138 + $0x18] sm:$0xff]
        %v173 = vld [vmem:[%s138 + $0x20] sm:$0xff]
        %v174 = vld [vmem:[%s138 + $0x28] sm:$0xff]
        %v175 = vld [vmem:[%s138 + $0x30] sm:$0xff]
        %v176 = vld [vmem:[%s138 + $0x38] sm:$0xff]
        %v177 = vld [vmem:[%s138 + $0x40] sm:$0xff]
        %v178 = vld [vmem:[%s138 + $0x48] sm:$0xff]
        %v179 = vld [vmem:[%s138 + $0x50] sm:$0xff]
        %v180 = vld [vmem:[%s138 + $0x58] sm:$0xff]
        %v181 = vld [vmem:[%s138 + $0x60] sm:$0xff]
        %v182 = vld [vmem:[%s138 + $0x68] sm:$0xff]
        %v183 = vld [vmem:[%s138 + $0x70] sm:$0xff]
        %v184 = vld [vmem:[%s138 + $0x78] sm:$0xff]
        %v185 = vld [vmem:[%s138 + $0x80] sm:$0xff]
        %v186 = vld [vmem:[%s138 + $0x88] sm:$0xff]
        %v187 = vld [vmem:[%s138 + $0x90] sm:$0xff]
        %v188 = vld [vmem:[%s138 + $0x98] sm:$0xff]
        %v189 = vld [vmem:[%s138 + $0xa0] sm:$0xff]
        %v190 = vld [vmem:[%s138 + $0xa8] sm:$0xff]
        %v191 = vld [vmem:[%s138 + $0xb0] sm:$0xff]
        %v192 = vld [vmem:[%s138 + $0xb8] sm:$0xff]
        %v193 = vld [vmem:[%s138 + $0xc0] sm:$0xff]
        %v194 = vld [vmem:[%s138 + $0xc8] sm:$0xff]
        %v195 = vld [vmem:[%s138 + $0xd0] sm:$0xff]
        %v196 = vld [vmem:[%s138 + $0xd8] sm:$0xff]
        %v197 = vld [vmem:[%s138 + $0xe0] sm:$0xff]
        %v198 = vld [vmem:[%s138 + $0xe8] sm:$0xff]
        %v199 = vld [vmem:[%s138 + $0xf0] sm:$0xff]
        %v200 = vld [vmem:[%s138 + $0xf8] sm:$0xff]
        %v205 = vunpack.c.l.b16 %v165
        %v206 = vunpack.c.l.b16 %v166
        %v207 = vunpack.c.l.b16 %v167
        %v208 = vunpack.c.l.b16 %v168
        %v209 = vpack.c.b16 %v206, %v205
        %v210 = vpack.c.b16 %v208, %v207
        %v243 = vunpack.c.l.b16 %v169
        %v244 = vunpack.c.h.b16 %v169
        %v245 = vunpack.c.l.b16 %v170
        %v246 = vunpack.c.h.b16 %v170
        %v247 = vunpack.c.l.b16 %v171
        %v248 = vunpack.c.h.b16 %v171
        %v249 = vunpack.c.l.b16 %v172
        %v250 = vunpack.c.h.b16 %v172
        %v251 = vunpack.c.l.b16 %v173
        %v252 = vunpack.c.h.b16 %v173
        %v253 = vunpack.c.l.b16 %v174
        %v254 = vunpack.c.h.b16 %v174
        %v255 = vunpack.c.l.b16 %v175
        %v256 = vunpack.c.h.b16 %v175
        %v257 = vunpack.c.l.b16 %v176
        %v258 = vunpack.c.h.b16 %v176
        %v259 = vunpack.c.l.b16 %v177
        %v260 = vunpack.c.h.b16 %v177
        %v261 = vunpack.c.l.b16 %v178
        %v262 = vunpack.c.h.b16 %v178
        %v263 = vunpack.c.l.b16 %v179
        %v264 = vunpack.c.h.b16 %v179
        %v265 = vunpack.c.l.b16 %v180
        %v266 = vunpack.c.h.b16 %v180
        %v267 = vunpack.c.l.b16 %v181
        %v268 = vunpack.c.h.b16 %v181
        %v269 = vunpack.c.l.b16 %v182
        %v270 = vunpack.c.h.b16 %v182
        %v271 = vunpack.c.l.b16 %v183
        %v272 = vunpack.c.h.b16 %v183
        %v273 = vunpack.c.l.b16 %v184
        %v274 = vunpack.c.h.b16 %v184
        %v275 = vunpack.c.l.b16 %v185
        %v276 = vunpack.c.h.b16 %v185
        %v277 = vunpack.c.l.b16 %v186
        %v278 = vunpack.c.h.b16 %v186
        %v279 = vunpack.c.l.b16 %v187
        %v280 = vunpack.c.h.b16 %v187
        %v281 = vunpack.c.l.b16 %v188
        %v282 = vunpack.c.h.b16 %v188
        %v283 = vunpack.c.l.b16 %v189
        %v284 = vunpack.c.h.b16 %v189
        %v285 = vunpack.c.l.b16 %v190
        %v286 = vunpack.c.h.b16 %v190
        %v287 = vunpack.c.l.b16 %v191
        %v288 = vunpack.c.h.b16 %v191
        %v289 = vunpack.c.l.b16 %v192
        %v290 = vunpack.c.h.b16 %v192
        %v291 = vunpack.c.l.b16 %v193
        %v292 = vunpack.c.h.b16 %v193
        %v293 = vunpack.c.l.b16 %v194
        %v294 = vunpack.c.h.b16 %v194
        %v295 = vunpack.c.l.b16 %v195
        %v296 = vunpack.c.h.b16 %v195
        %v297 = vunpack.c.l.b16 %v196
        %v298 = vunpack.c.h.b16 %v196
        %v299 = vunpack.c.l.b16 %v197
        %v300 = vunpack.c.h.b16 %v197
        %v301 = vunpack.c.l.b16 %v198
        %v302 = vunpack.c.h.b16 %v198
        %v303 = vunpack.c.l.b16 %v199
        %v304 = vunpack.c.h.b16 %v199
        %v305 = vunpack.c.l.b16 %v200
        %v306 = vunpack.c.h.b16 %v200
        %v307 = vpack.c.b16 %v275, %v243
        %v308 = vpack.c.b16 %v276, %v244
        %v309 = vpack.c.b16 %v277, %v245
        %v310 = vpack.c.b16 %v278, %v246
        %v311 = vpack.c.b16 %v279, %v247
        %v312 = vpack.c.b16 %v280, %v248
        %v313 = vpack.c.b16 %v281, %v249
        %v314 = vpack.c.b16 %v282, %v250
        %v315 = vpack.c.b16 %v283, %v251
        %v316 = vpack.c.b16 %v284, %v252
        %v317 = vpack.c.b16 %v285, %v253
        %v318 = vpack.c.b16 %v286, %v254
        %v319 = vpack.c.b16 %v287, %v255
        %v320 = vpack.c.b16 %v288, %v256
        %v321 = vpack.c.b16 %v289, %v257
        %v322 = vpack.c.b16 %v290, %v258
        %v323 = vpack.c.b16 %v291, %v259
        %v324 = vpack.c.b16 %v292, %v260
        %v325 = vpack.c.b16 %v293, %v261
        %v326 = vpack.c.b16 %v294, %v262
        %v327 = vpack.c.b16 %v295, %v263
        %v328 = vpack.c.b16 %v296, %v264
        %v329 = vpack.c.b16 %v297, %v265
        %v330 = vpack.c.b16 %v298, %v266
        %v331 = vpack.c.b16 %v299, %v267
        %v332 = vpack.c.b16 %v300, %v268
        %v333 = vpack.c.b16 %v301, %v269
        %v334 = vpack.c.b16 %v302, %v270
        %v335 = vpack.c.b16 %v303, %v271
        %v336 = vpack.c.b16 %v304, %v272
        %v337 = vpack.c.b16 %v305, %v273
        %v338 = vpack.c.b16 %v306, %v274
        %vm371 = vcmask 130048
        %v373 = vsel %vm371, %v209, 0
        %v376 = vsel %vm371, %v210, 0
        %378 = vmatprep.subr.bf16.mxu0 %v308
        %379 = vmatpush1.bf16.msra.mxu0 %v307
        %380 = vmatprep.subr.bf16.mxu0 0
        %381 = vmatpush1.bf16.msra.mxu0 0
        %382 = vmatprep.subr.bf16.mxu0 0
        %383 = vmatpush1.bf16.msra.mxu0 0
        %384 = vmatprep.subr.bf16.mxu0 0
        %385 = vmatpush1.bf16.msra.mxu0 0
        %386 = vmatprep.subr.bf16.mxu0 0
        %387 = vmatpush1.bf16.msra.mxu0 0
        %388 = vmatprep.subr.bf16.mxu0 0
        %389 = vmatpush1.bf16.msra.mxu0 0
        %390 = vmatprep.subr.bf16.mxu0 0
        %391 = vmatpush1.bf16.msra.mxu0 0
        %392 = vmatprep.subr.bf16.mxu0 0
        %393 = vmatpush1.bf16.msra.mxu0 0
        %394 = vmatprep.subr.bf16.mxu0 0
        %395 = vmatpush1.bf16.msra.mxu0 0
        %396 = vmatprep.subr.bf16.mxu0 0
        %397 = vmatpush1.bf16.msra.mxu0 0
        %398 = vmatprep.subr.bf16.mxu0 0
        %399 = vmatpush1.bf16.msra.mxu0 0
        %400 = vmatprep.subr.bf16.mxu0 0
        %401 = vmatpush1.bf16.msra.mxu0 0
        %402 = vmatprep.subr.bf16.mxu0 0
        %403 = vmatpush1.bf16.msra.mxu0 0
        %404 = vmatprep.subr.bf16.mxu0 0
        %405 = vmatpush1.bf16.msra.mxu0 0
        %406 = vmatprep.subr.bf16.mxu0 0
        %407 = vmatpush1.bf16.msra.mxu0 0
        %408 = vmatprep.subr.bf16.mxu0 0
        %409 = vmatpush1.bf16.msra.mxu0 0
        %410 = vmatprep.mubr.bf16.mxu0 0
        %411 = vmatmul.mubr.bf16.gmra.mrb[0].mxu0 %v373
        %v412 = vpop.f32.mrb[0].mxu0
        %v413 = vadd.f32 0.0, %v412
        %v414 = vpop.f32.mrb[0].mxu0
        %v415 = vadd.f32 0.0, %v414
        %v416 = vpop.f32.mrb[0].mxu0
        %v417 = vadd.f32 0.0, %v416
        %v418 = vpop.f32.mrb[0].mxu0
        %v419 = vadd.f32 0.0, %v418
        %420 = vmatprep.mubr.bf16.mxu0 0
        %421 = vmatmul.mubr.bf16.gmra.mrb[0].mxu0 %v376
        %v422 = vpop.f32.mrb[0].mxu0
        %v423 = vadd.f32 0.0, %v422
        %v424 = vpop.f32.mrb[0].mxu0
        %v425 = vadd.f32 0.0, %v424
        %v426 = vpop.f32.mrb[0].mxu0
        %v427 = vadd.f32 0.0, %v426
        %v428 = vpop.f32.mrb[0].mxu0
        %v429 = vadd.f32 0.0, %v428
        %430 = vdwg.mxu0
        %431 = vmatprep.subr.bf16.mxu0 %v310
        %432 = vmatpush1.bf16.msra.mxu0 %v309
        %433 = vmatprep.subr.bf16.mxu0 0
        %434 = vmatpush1.bf16.msra.mxu0 0
        %435 = vmatprep.subr.bf16.mxu0 0
        %436 = vmatpush1.bf16.msra.mxu0 0
        %437 = vmatprep.subr.bf16.mxu0 0
        %438 = vmatpush1.bf16.msra.mxu0 0
        %439 = vmatprep.subr.bf16.mxu0 0
        %440 = vmatpush1.bf16.msra.mxu0 0
        %441 = vmatprep.subr.bf16.mxu0 0
        %442 = vmatpush1.bf16.msra.mxu0 0
        %443 = vmatprep.subr.bf16.mxu0 0
        %444 = vmatpush1.bf16.msra.mxu0 0
        %445 = vmatprep.subr.bf16.mxu0 0
        %446 = vmatpush1.bf16.msra.mxu0 0
        %447 = vmatprep.subr.bf16.mxu0 0
        %448 = vmatpush1.bf16.msra.mxu0 0
        %449 = vmatprep.subr.bf16.mxu0 0
        %450 = vmatpush1.bf16.msra.mxu0 0
        %451 = vmatprep.subr.bf16.mxu0 0
        %452 = vmatpush1.bf16.msra.mxu0 0
        %453 = vmatprep.subr.bf16.mxu0 0
        %454 = vmatpush1.bf16.msra.mxu0 0
        %455 = vmatprep.subr.bf16.mxu0 0
        %456 = vmatpush1.bf16.msra.mxu0 0
        %457 = vmatprep.subr.bf16.mxu0 0
        %458 = vmatpush1.bf16.msra.mxu0 0
        %459 = vmatprep.subr.bf16.mxu0 0
        %460 = vmatpush1.bf16.msra.mxu0 0
        %461 = vmatprep.subr.bf16.mxu0 0
        %462 = vmatpush1.bf16.msra.mxu0 0
        %463 = vmatprep.mubr.bf16.mxu0 0
        %464 = vmatmul.mubr.bf16.gmra.mrb[0].mxu0 %v373
        %v465 = vpop.f32.mrb[0].mxu0
        %v466 = vadd.f32 0.0, %v465
        %v467 = vpop.f32.mrb[0].mxu0
        %v468 = vadd.f32 0.0, %v467
        %v469 = vpop.f32.mrb[0].mxu0
        %v470 = vadd.f32 0.0, %v469
        %v471 = vpop.f32.mrb[0].mxu0
        %v472 = vadd.f32 0.0, %v471
        %473 = vmatprep.mubr.bf16.mxu0 0
        %474 = vmatmul.mubr.bf16.gmra.mrb[0].mxu0 %v376
        %v475 = vpop.f32.mrb[0].mxu0
        %v476 = vadd.f32 0.0, %v475
        %v477 = vpop.f32.mrb[0].mxu0
        %v478 = vadd.f32 0.0, %v477
        %v479 = vpop.f32.mrb[0].mxu0
        %v480 = vadd.f32 0.0, %v479
        %v481 = vpop.f32.mrb[0].mxu0
        %v482 = vadd.f32 0.0, %v481
        %483 = vdwg.mxu0
        %484 = vmatprep.subr.bf16.mxu0 %v312
        %485 = vmatpush1.bf16.msra.mxu0 %v311
        %486 = vmatprep.subr.bf16.mxu0 0
        %487 = vmatpush1.bf16.msra.mxu0 0
        %488 = vmatprep.subr.bf16.mxu0 0
        %489 = vmatpush1.bf16.msra.mxu0 0
        %490 = vmatprep.subr.bf16.mxu0 0
        %491 = vmatpush1.bf16.msra.mxu0 0
        %492 = vmatprep.subr.bf16.mxu0 0
        %493 = vmatpush1.bf16.msra.mxu0 0
        %494 = vmatprep.subr.bf16.mxu0 0
        %495 = vmatpush1.bf16.msra.mxu0 0
        %496 = vmatprep.subr.bf16.mxu0 0
        %497 = vmatpush1.bf16.msra.mxu0 0
        %498 = vmatprep.subr.bf16.mxu0 0
        %499 = vmatpush1.bf16.msra.mxu0 0
        %500 = vmatprep.subr.bf16.mxu0 0
        %501 = vmatpush1.bf16.msra.mxu0 0
        %502 = vmatprep.subr.bf16.mxu0 0
        %503 = vmatpush1.bf16.msra.mxu0 0
        %504 = vmatprep.subr.bf16.mxu0 0
        %505 = vmatpush1.bf16.msra.mxu0 0
        %506 = vmatprep.subr.bf16.mxu0 0
        %507 = vmatpush1.bf16.msra.mxu0 0
        %508 = vmatprep.subr.bf16.mxu0 0
        %509 = vmatpush1.bf16.msra.mxu0 0
        %510 = vmatprep.subr.bf16.mxu0 0
        %511 = vmatpush1.bf16.msra.mxu0 0
        %512 = vmatprep.subr.bf16.mxu0 0
        %513 = vmatpush1.bf16.msra.mxu0 0
        %514 = vmatprep.subr.bf16.mxu0 0
        %515 = vmatpush1.bf16.msra.mxu0 0
        %516 = vmatprep.mubr.bf16.mxu0 0
        %517 = vmatmul.mubr.bf16.gmra.mrb[0].mxu0 %v373
        %v518 = vpop.f32.mrb[0].mxu0
        %v519 = vadd.f32 0.0, %v518
        %v520 = vpop.f32.mrb[0].mxu0
        %v521 = vadd.f32 0.0, %v520
        %v522 = vpop.f32.mrb[0].mxu0
        %v523 = vadd.f32 0.0, %v522
        %v524 = vpop.f32.mrb[0].mxu0
        %v525 = vadd.f32 0.0, %v524
        %526 = vmatprep.mubr.bf16.mxu0 0
        %527 = vmatmul.mubr.bf16.gmra.mrb[0].mxu0 %v376
        %v528 = vpop.f32.mrb[0].mxu0
        %v529 = vadd.f32 0.0, %v528
        %v530 = vpop.f32.mrb[0].mxu0
        %v531 = vadd.f32 0.0, %v530
        %v532 = vpop.f32.mrb[0].mxu0
        %v533 = vadd.f32 0.0, %v532
        %v534 = vpop.f32.mrb[0].mxu0
        %v535 = vadd.f32 0.0, %v534
        %536 = vdwg.mxu0
        %537 = vmatprep.subr.bf16.mxu0 %v314
        %538 = vmatpush1.bf16.msra.mxu0 %v313
        %539 = vmatprep.subr.bf16.mxu0 0
        %540 = vmatpush1.bf16.msra.mxu0 0
        %541 = vmatprep.subr.bf16.mxu0 0
        %542 = vmatpush1.bf16.msra.mxu0 0
        %543 = vmatprep.subr.bf16.mxu0 0
        %544 = vmatpush1.bf16.msra.mxu0 0
        %545 = vmatprep.subr.bf16.mxu0 0
        %546 = vmatpush1.bf16.msra.mxu0 0
        %547 = vmatprep.subr.bf16.mxu0 0
        %548 = vmatpush1.bf16.msra.mxu0 0
        %549 = vmatprep.subr.bf16.mxu0 0
        %550 = vmatpush1.bf16.msra.mxu0 0
        %551 = vmatprep.subr.bf16.mxu0 0
        %552 = vmatpush1.bf16.msra.mxu0 0
        %553 = vmatprep.subr.bf16.mxu0 0
        %554 = vmatpush1.bf16.msra.mxu0 0
        %555 = vmatprep.subr.bf16.mxu0 0
        %556 = vmatpush1.bf16.msra.mxu0 0
        %557 = vmatprep.subr.bf16.mxu0 0
        %558 = vmatpush1.bf16.msra.mxu0 0
        %559 = vmatprep.subr.bf16.mxu0 0
        %560 = vmatpush1.bf16.msra.mxu0 0
        %561 = vmatprep.subr.bf16.mxu0 0
        %562 = vmatpush1.bf16.msra.mxu0 0
        %563 = vmatprep.subr.bf16.mxu0 0
        %564 = vmatpush1.bf16.msra.mxu0 0
        %565 = vmatprep.subr.bf16.mxu0 0
        %566 = vmatpush1.bf16.msra.mxu0 0
        %567 = vmatprep.subr.bf16.mxu0 0
        %568 = vmatpush1.bf16.msra.mxu0 0
        %569 = vmatprep.mubr.bf16.mxu0 0
        %570 = vmatmul.mubr.bf16.gmra.mrb[0].mxu0 %v373
        %v571 = vpop.f32.mrb[0].mxu0
        %v572 = vadd.f32 0.0, %v571
        %v573 = vpop.f32.mrb[0].mxu0
        %v574 = vadd.f32 0.0, %v573
        %v575 = vpop.f32.mrb[0].mxu0
        %v576 = vadd.f32 0.0, %v575
        %v577 = vpop.f32.mrb[0].mxu0
        %v578 = vadd.f32 0.0, %v577
        %579 = vmatprep.mubr.bf16.mxu0 0
        %580 = vmatmul.mubr.bf16.gmra.mrb[0].mxu0 %v376
        %v581 = vpop.f32.mrb[0].mxu0
        %v582 = vadd.f32 0.0, %v581
        %v583 = vpop.f32.mrb[0].mxu0
        %v584 = vadd.f32 0.0, %v583
        %v585 = vpop.f32.mrb[0].mxu0
        %v586 = vadd.f32 0.0, %v585
        %v587 = vpop.f32.mrb[0].mxu0
        %v588 = vadd.f32 0.0, %v587
        %589 = vdwg.mxu0
        %590 = vmatprep.subr.bf16.mxu0 %v316
        %591 = vmatpush1.bf16.msra.mxu0 %v315
        %592 = vmatprep.subr.bf16.mxu0 0
        %593 = vmatpush1.bf16.msra.mxu0 0
        %594 = vmatprep.subr.bf16.mxu0 0
        %595 = vmatpush1.bf16.msra.mxu0 0
        %596 = vmatprep.subr.bf16.mxu0 0
        %597 = vmatpush1.bf16.msra.mxu0 0
        %598 = vmatprep.subr.bf16.mxu0 0
        %599 = vmatpush1.bf16.msra.mxu0 0
        %600 = vmatprep.subr.bf16.mxu0 0
        %601 = vmatpush1.bf16.msra.mxu0 0
        %602 = vmatprep.subr.bf16.mxu0 0
        %603 = vmatpush1.bf16.msra.mxu0 0
        %604 = vmatprep.subr.bf16.mxu0 0
        %605 = vmatpush1.bf16.msra.mxu0 0
        %606 = vmatprep.subr.bf16.mxu0 0
        %607 = vmatpush1.bf16.msra.mxu0 0
        %608 = vmatprep.subr.bf16.mxu0 0
        %609 = vmatpush1.bf16.msra.mxu0 0
        %610 = vmatprep.subr.bf16.mxu0 0
        %611 = vmatpush1.bf16.msra.mxu0 0
        %612 = vmatprep.subr.bf16.mxu0 0
        %613 = vmatpush1.bf16.msra.mxu0 0
        %614 = vmatprep.subr.bf16.mxu0 0
        %615 = vmatpush1.bf16.msra.mxu0 0
        %616 = vmatprep.subr.bf16.mxu0 0
        %617 = vmatpush1.bf16.msra.mxu0 0
        %618 = vmatprep.subr.bf16.mxu0 0
        %619 = vmatpush1.bf16.msra.mxu0 0
        %620 = vmatprep.subr.bf16.mxu0 0
        %621 = vmatpush1.bf16.msra.mxu0 0
        %622 = vmatprep.mubr.bf16.mxu0 0
        %623 = vmatmul.mubr.bf16.gmra.mrb[0].mxu0 %v373
        %v624 = vpop.f32.mrb[0].mxu0
        %v625 = vadd.f32 0.0, %v624
        %v626 = vpop.f32.mrb[0].mxu0
        %v627 = vadd.f32 0.0, %v626
        %v628 = vpop.f32.mrb[0].mxu0
        %v629 = vadd.f32 0.0, %v628
        %v630 = vpop.f32.mrb[0].mxu0
        %v631 = vadd.f32 0.0, %v630
        %632 = vmatprep.mubr.bf16.mxu0 0
        %633 = vmatmul.mubr.bf16.gmra.mrb[0].mxu0 %v376
        %v634 = vpop.f32.mrb[0].mxu0
        %v635 = vadd.f32 0.0, %v634
        %v636 = vpop.f32.mrb[0].mxu0
        %v637 = vadd.f32 0.0, %v636
        %v638 = vpop.f32.mrb[0].mxu0
        %v639 = vadd.f32 0.0, %v638
        %v640 = vpop.f32.mrb[0].mxu0
        %v641 = vadd.f32 0.0, %v640
        %642 = vdwg.mxu0
        %643 = vmatprep.subr.bf16.mxu0 %v318
        %644 = vmatpush1.bf16.msra.mxu0 %v317
        %645 = vmatprep.subr.bf16.mxu0 0
        %646 = vmatpush1.bf16.msra.mxu0 0
        %647 = vmatprep.subr.bf16.mxu0 0
        %648 = vmatpush1.bf16.msra.mxu0 0
        %649 = vmatprep.subr.bf16.mxu0 0
        %650 = vmatpush1.bf16.msra.mxu0 0
        %651 = vmatprep.subr.bf16.mxu0 0
        %652 = vmatpush1.bf16.msra.mxu0 0
        %653 = vmatprep.subr.bf16.mxu0 0
        %654 = vmatpush1.bf16.msra.mxu0 0
        %655 = vmatprep.subr.bf16.mxu0 0
        %656 = vmatpush1.bf16.msra.mxu0 0
        %657 = vmatprep.subr.bf16.mxu0 0
        %658 = vmatpush1.bf16.msra.mxu0 0
        %659 = vmatprep.subr.bf16.mxu0 0
        %660 = vmatpush1.bf16.msra.mxu0 0
        %661 = vmatprep.subr.bf16.mxu0 0
        %662 = vmatpush1.bf16.msra.mxu0 0
        %663 = vmatprep.subr.bf16.mxu0 0
        %664 = vmatpush1.bf16.msra.mxu0 0
        %665 = vmatprep.subr.bf16.mxu0 0
        %666 = vmatpush1.bf16.msra.mxu0 0
        %667 = vmatprep.subr.bf16.mxu0 0
        %668 = vmatpush1.bf16.msra.mxu0 0
        %669 = vmatprep.subr.bf16.mxu0 0
        %670 = vmatpush1.bf16.msra.mxu0 0
        %671 = vmatprep.subr.bf16.mxu0 0
        %672 = vmatpush1.bf16.msra.mxu0 0
        %673 = vmatprep.subr.bf16.mxu0 0
        %674 = vmatpush1.bf16.msra.mxu0 0
        %675 = vmatprep.mubr.bf16.mxu0 0
        %676 = vmatmul.mubr.bf16.gmra.mrb[0].mxu0 %v373
        %v677 = vpop.f32.mrb[0].mxu0
        %v678 = vadd.f32 0.0, %v677
        %v679 = vpop.f32.mrb[0].mxu0
        %v680 = vadd.f32 0.0, %v679
        %v681 = vpop.f32.mrb[0].mxu0
        %v682 = vadd.f32 0.0, %v681
        %v683 = vpop.f32.mrb[0].mxu0
        %v684 = vadd.f32 0.0, %v683
        %685 = vmatprep.mubr.bf16.mxu0 0
        %686 = vmatmul.mubr.bf16.gmra.mrb[0].mxu0 %v376
        %v687 = vpop.f32.mrb[0].mxu0
        %v688 = vadd.f32 0.0, %v687
        %v689 = vpop.f32.mrb[0].mxu0
        %v690 = vadd.f32 0.0, %v689
        %v691 = vpop.f32.mrb[0].mxu0
        %v692 = vadd.f32 0.0, %v691
        %v693 = vpop.f32.mrb[0].mxu0
        %v694 = vadd.f32 0.0, %v693
        %695 = vdwg.mxu0
        %696 = vmatprep.subr.bf16.mxu0 %v320
        %697 = vmatpush1.bf16.msra.mxu0 %v319
        %698 = vmatprep.subr.bf16.mxu0 0
        %699 = vmatpush1.bf16.msra.mxu0 0
        %700 = vmatprep.subr.bf16.mxu0 0
        %701 = vmatpush1.bf16.msra.mxu0 0
        %702 = vmatprep.subr.bf16.mxu0 0
        %703 = vmatpush1.bf16.msra.mxu0 0
        %704 = vmatprep.subr.bf16.mxu0 0
        %705 = vmatpush1.bf16.msra.mxu0 0
        %706 = vmatprep.subr.bf16.mxu0 0
        %707 = vmatpush1.bf16.msra.mxu0 0
        %708 = vmatprep.subr.bf16.mxu0 0
        %709 = vmatpush1.bf16.msra.mxu0 0
        %710 = vmatprep.subr.bf16.mxu0 0
        %711 = vmatpush1.bf16.msra.mxu0 0
        %712 = vmatprep.subr.bf16.mxu0 0
        %713 = vmatpush1.bf16.msra.mxu0 0
        %714 = vmatprep.subr.bf16.mxu0 0
        %715 = vmatpush1.bf16.msra.mxu0 0
        %716 = vmatprep.subr.bf16.mxu0 0
        %717 = vmatpush1.bf16.msra.mxu0 0
        %718 = vmatprep.subr.bf16.mxu0 0
        %719 = vmatpush1.bf16.msra.mxu0 0
        %720 = vmatprep.subr.bf16.mxu0 0
        %721 = vmatpush1.bf16.msra.mxu0 0
        %722 = vmatprep.subr.bf16.mxu0 0
        %723 = vmatpush1.bf16.msra.mxu0 0
        %724 = vmatprep.subr.bf16.mxu0 0
        %725 = vmatpush1.bf16.msra.mxu0 0
        %726 = vmatprep.subr.bf16.mxu0 0
        %727 = vmatpush1.bf16.msra.mxu0 0
        %728 = vmatprep.mubr.bf16.mxu0 0
        %729 = vmatmul.mubr.bf16.gmra.mrb[0].mxu0 %v373
        %v730 = vpop.f32.mrb[0].mxu0
        %v731 = vadd.f32 0.0, %v730
        %v732 = vpop.f32.mrb[0].mxu0
        %v733 = vadd.f32 0.0, %v732
        %v734 = vpop.f32.mrb[0].mxu0
        %v735 = vadd.f32 0.0, %v734
        %v736 = vpop.f32.mrb[0].mxu0
        %v737 = vadd.f32 0.0, %v736
        %738 = vmatprep.mubr.bf16.mxu0 0
        %739 = vmatmul.mubr.bf16.gmra.mrb[0].mxu0 %v376
        %v740 = vpop.f32.mrb[0].mxu0
        %v741 = vadd.f32 0.0, %v740
        %v742 = vpop.f32.mrb[0].mxu0
        %v743 = vadd.f32 0.0, %v742
        %v744 = vpop.f32.mrb[0].mxu0
        %v745 = vadd.f32 0.0, %v744
        %v746 = vpop.f32.mrb[0].mxu0
        %v747 = vadd.f32 0.0, %v746
        %748 = vdwg.mxu0
        %749 = vmatprep.subr.bf16.mxu0 %v322
        %750 = vmatpush1.bf16.msra.mxu0 %v321
        %751 = vmatprep.subr.bf16.mxu0 0
        %752 = vmatpush1.bf16.msra.mxu0 0
        %753 = vmatprep.subr.bf16.mxu0 0
        %754 = vmatpush1.bf16.msra.mxu0 0
        %755 = vmatprep.subr.bf16.mxu0 0
        %756 = vmatpush1.bf16.msra.mxu0 0
        %757 = vmatprep.subr.bf16.mxu0 0
        %758 = vmatpush1.bf16.msra.mxu0 0
        %759 = vmatprep.subr.bf16.mxu0 0
        %760 = vmatpush1.bf16.msra.mxu0 0
        %761 = vmatprep.subr.bf16.mxu0 0
        %762 = vmatpush1.bf16.msra.mxu0 0
        %763 = vmatprep.subr.bf16.mxu0 0
        %764 = vmatpush1.bf16.msra.mxu0 0
        %765 = vmatprep.subr.bf16.mxu0 0
        %766 = vmatpush1.bf16.msra.mxu0 0
        %767 = vmatprep.subr.bf16.mxu0 0
        %768 = vmatpush1.bf16.msra.mxu0 0
        %769 = vmatprep.subr.bf16.mxu0 0
        %770 = vmatpush1.bf16.msra.mxu0 0
        %771 = vmatprep.subr.bf16.mxu0 0
        %772 = vmatpush1.bf16.msra.mxu0 0
        %773 = vmatprep.subr.bf16.mxu0 0
        %774 = vmatpush1.bf16.msra.mxu0 0
        %775 = vmatprep.subr.bf16.mxu0 0
        %776 = vmatpush1.bf16.msra.mxu0 0
        %777 = vmatprep.subr.bf16.mxu0 0
        %778 = vmatpush1.bf16.msra.mxu0 0
        %779 = vmatprep.subr.bf16.mxu0 0
        %780 = vmatpush1.bf16.msra.mxu0 0
        %781 = vmatprep.mubr.bf16.mxu0 0
        %782 = vmatmul.mubr.bf16.gmra.mrb[0].mxu0 %v373
        %v783 = vpop.f32.mrb[0].mxu0
        %v784 = vadd.f32 0.0, %v783
        %v785 = vpop.f32.mrb[0].mxu0
        %v786 = vadd.f32 0.0, %v785
        %v787 = vpop.f32.mrb[0].mxu0
        %v788 = vadd.f32 0.0, %v787
        %v789 = vpop.f32.mrb[0].mxu0
        %v790 = vadd.f32 0.0, %v789
        %791 = vmatprep.mubr.bf16.mxu0 0
        %792 = vmatmul.mubr.bf16.gmra.mrb[0].mxu0 %v376
        %v793 = vpop.f32.mrb[0].mxu0
        %v794 = vadd.f32 0.0, %v793
        %v795 = vpop.f32.mrb[0].mxu0
        %v796 = vadd.f32 0.0, %v795
        %v797 = vpop.f32.mrb[0].mxu0
        %v798 = vadd.f32 0.0, %v797
        %v799 = vpop.f32.mrb[0].mxu0
        %v800 = vadd.f32 0.0, %v799
        %801 = vdwg.mxu0
        %802 = vmatprep.subr.bf16.mxu0 %v324
        %803 = vmatpush1.bf16.msra.mxu0 %v323
        %804 = vmatprep.subr.bf16.mxu0 0
        %805 = vmatpush1.bf16.msra.mxu0 0
        %806 = vmatprep.subr.bf16.mxu0 0
        %807 = vmatpush1.bf16.msra.mxu0 0
        %808 = vmatprep.subr.bf16.mxu0 0
        %809 = vmatpush1.bf16.msra.mxu0 0
        %810 = vmatprep.subr.bf16.mxu0 0
        %811 = vmatpush1.bf16.msra.mxu0 0
        %812 = vmatprep.subr.bf16.mxu0 0
        %813 = vmatpush1.bf16.msra.mxu0 0
        %814 = vmatprep.subr.bf16.mxu0 0
        %815 = vmatpush1.bf16.msra.mxu0 0
        %816 = vmatprep.subr.bf16.mxu0 0
        %817 = vmatpush1.bf16.msra.mxu0 0
        %818 = vmatprep.subr.bf16.mxu0 0
        %819 = vmatpush1.bf16.msra.mxu0 0
        %820 = vmatprep.subr.bf16.mxu0 0
        %821 = vmatpush1.bf16.msra.mxu0 0
        %822 = vmatprep.subr.bf16.mxu0 0
        %823 = vmatpush1.bf16.msra.mxu0 0
        %824 = vmatprep.subr.bf16.mxu0 0
        %825 = vmatpush1.bf16.msra.mxu0 0
        %826 = vmatprep.subr.bf16.mxu0 0
        %827 = vmatpush1.bf16.msra.mxu0 0
        %828 = vmatprep.subr.bf16.mxu0 0
        %829 = vmatpush1.bf16.msra.mxu0 0
        %830 = vmatprep.subr.bf16.mxu0 0
        %831 = vmatpush1.bf16.msra.mxu0 0
        %832 = vmatprep.subr.bf16.mxu0 0
        %833 = vmatpush1.bf16.msra.mxu0 0
        %834 = vmatprep.mubr.bf16.mxu0 0
        %835 = vmatmul.mubr.bf16.gmra.mrb[0].mxu0 %v373
        %v836 = vpop.f32.mrb[0].mxu0
        %v837 = vadd.f32 0.0, %v836
        %v838 = vpop.f32.mrb[0].mxu0
        %v839 = vadd.f32 0.0, %v838
        %v840 = vpop.f32.mrb[0].mxu0
        %v841 = vadd.f32 0.0, %v840
        %v842 = vpop.f32.mrb[0].mxu0
        %v843 = vadd.f32 0.0, %v842
        %844 = vmatprep.mubr.bf16.mxu0 0
        %845 = vmatmul.mubr.bf16.gmra.mrb[0].mxu0 %v376
        %v846 = vpop.f32.mrb[0].mxu0
        %v847 = vadd.f32 0.0, %v846
        %v848 = vpop.f32.mrb[0].mxu0
        %v849 = vadd.f32 0.0, %v848
        %v850 = vpop.f32.mrb[0].mxu0
        %v851 = vadd.f32 0.0, %v850
        %v852 = vpop.f32.mrb[0].mxu0
        %v853 = vadd.f32 0.0, %v852
        %854 = vdwg.mxu0
        %855 = vmatprep.subr.bf16.mxu0 %v326
        %856 = vmatpush1.bf16.msra.mxu0 %v325
        %857 = vmatprep.subr.bf16.mxu0 0
        %858 = vmatpush1.bf16.msra.mxu0 0
        %859 = vmatprep.subr.bf16.mxu0 0
        %860 = vmatpush1.bf16.msra.mxu0 0
        %861 = vmatprep.subr.bf16.mxu0 0
        %862 = vmatpush1.bf16.msra.mxu0 0
        %863 = vmatprep.subr.bf16.mxu0 0
        %864 = vmatpush1.bf16.msra.mxu0 0
        %865 = vmatprep.subr.bf16.mxu0 0
        %866 = vmatpush1.bf16.msra.mxu0 0
        %867 = vmatprep.subr.bf16.mxu0 0
        %868 = vmatpush1.bf16.msra.mxu0 0
        %869 = vmatprep.subr.bf16.mxu0 0
        %870 = vmatpush1.bf16.msra.mxu0 0
        %871 = vmatprep.subr.bf16.mxu0 0
        %872 = vmatpush1.bf16.msra.mxu0 0
        %873 = vmatprep.subr.bf16.mxu0 0
        %874 = vmatpush1.bf16.msra.mxu0 0
        %875 = vmatprep.subr.bf16.mxu0 0
        %876 = vmatpush1.bf16.msra.mxu0 0
        %877 = vmatprep.subr.bf16.mxu0 0
        %878 = vmatpush1.bf16.msra.mxu0 0
        %879 = vmatprep.subr.bf16.mxu0 0
        %880 = vmatpush1.bf16.msra.mxu0 0
        %881 = vmatprep.subr.bf16.mxu0 0
        %882 = vmatpush1.bf16.msra.mxu0 0
        %883 = vmatprep.subr.bf16.mxu0 0
        %884 = vmatpush1.bf16.msra.mxu0 0
        %885 = vmatprep.subr.bf16.mxu0 0
        %886 = vmatpush1.bf16.msra.mxu0 0
        %887 = vmatprep.mubr.bf16.mxu0 0
        %888 = vmatmul.mubr.bf16.gmra.mrb[0].mxu0 %v373
        %v889 = vpop.f32.mrb[0].mxu0
        %v890 = vadd.f32 0.0, %v889
        %v891 = vpop.f32.mrb[0].mxu0
        %v892 = vadd.f32 0.0, %v891
        %v893 = vpop.f32.mrb[0].mxu0
        %v894 = vadd.f32 0.0, %v893
        %v895 = vpop.f32.mrb[0].mxu0
        %v896 = vadd.f32 0.0, %v895
        %897 = vmatprep.mubr.bf16.mxu0 0
        %898 = vmatmul.mubr.bf16.gmra.mrb[0].mxu0 %v376
        %v899 = vpop.f32.mrb[0].mxu0
        %v900 = vadd.f32 0.0, %v899
        %v901 = vpop.f32.mrb[0].mxu0
        %v902 = vadd.f32 0.0, %v901
        %v903 = vpop.f32.mrb[0].mxu0
        %v904 = vadd.f32 0.0, %v903
        %v905 = vpop.f32.mrb[0].mxu0
        %v906 = vadd.f32 0.0, %v905
        %907 = vdwg.mxu0
        %908 = vmatprep.subr.bf16.mxu0 %v328
        %909 = vmatpush1.bf16.msra.mxu0 %v327
        %910 = vmatprep.subr.bf16.mxu0 0
        %911 = vmatpush1.bf16.msra.mxu0 0
        %912 = vmatprep.subr.bf16.mxu0 0
        %913 = vmatpush1.bf16.msra.mxu0 0
        %914 = vmatprep.subr.bf16.mxu0 0
        %915 = vmatpush1.bf16.msra.mxu0 0
        %916 = vmatprep.subr.bf16.mxu0 0
        %917 = vmatpush1.bf16.msra.mxu0 0
        %918 = vmatprep.subr.bf16.mxu0 0
        %919 = vmatpush1.bf16.msra.mxu0 0
        %920 = vmatprep.subr.bf16.mxu0 0
        %921 = vmatpush1.bf16.msra.mxu0 0
        %922 = vmatprep.subr.bf16.mxu0 0
        %923 = vmatpush1.bf16.msra.mxu0 0
        %924 = vmatprep.subr.bf16.mxu0 0
        %925 = vmatpush1.bf16.msra.mxu0 0
        %926 = vmatprep.subr.bf16.mxu0 0
        %927 = vmatpush1.bf16.msra.mxu0 0
        %928 = vmatprep.subr.bf16.mxu0 0
        %929 = vmatpush1.bf16.msra.mxu0 0
        %930 = vmatprep.subr.bf16.mxu0 0
        %931 = vmatpush1.bf16.msra.mxu0 0
        %932 = vmatprep.subr.bf16.mxu0 0
        %933 = vmatpush1.bf16.msra.mxu0 0
        %934 = vmatprep.subr.bf16.mxu0 0
        %935 = vmatpush1.bf16.msra.mxu0 0
        %936 = vmatprep.subr.bf16.mxu0 0
        %937 = vmatpush1.bf16.msra.mxu0 0
        %938 = vmatprep.subr.bf16.mxu0 0
        %939 = vmatpush1.bf16.msra.mxu0 0
        %940 = vmatprep.mubr.bf16.mxu0 0
        %941 = vmatmul.mubr.bf16.gmra.mrb[0].mxu0 %v373
        %v942 = vpop.f32.mrb[0].mxu0
        %v943 = vadd.f32 0.0, %v942
        %v944 = vpop.f32.mrb[0].mxu0
        %v945 = vadd.f32 0.0, %v944
        %v946 = vpop.f32.mrb[0].mxu0
        %v947 = vadd.f32 0.0, %v946
        %v948 = vpop.f32.mrb[0].mxu0
        %v949 = vadd.f32 0.0, %v948
        %950 = vmatprep.mubr.bf16.mxu0 0
        %951 = vmatmul.mubr.bf16.gmra.mrb[0].mxu0 %v376
        %v952 = vpop.f32.mrb[0].mxu0
        %v953 = vadd.f32 0.0, %v952
        %v954 = vpop.f32.mrb[0].mxu0
        %v955 = vadd.f32 0.0, %v954
        %v956 = vpop.f32.mrb[0].mxu0
        %v957 = vadd.f32 0.0, %v956
        %v958 = vpop.f32.mrb[0].mxu0
        %v959 = vadd.f32 0.0, %v958
        %960 = vdwg.mxu0
        %961 = vmatprep.subr.bf16.mxu0 %v330
        %962 = vmatpush1.bf16.msra.mxu0 %v329
        %963 = vmatprep.subr.bf16.mxu0 0
        %964 = vmatpush1.bf16.msra.mxu0 0
        %965 = vmatprep.subr.bf16.mxu0 0
        %966 = vmatpush1.bf16.msra.mxu0 0
        %967 = vmatprep.subr.bf16.mxu0 0
        %968 = vmatpush1.bf16.msra.mxu0 0
        %969 = vmatprep.subr.bf16.mxu0 0
        %970 = vmatpush1.bf16.msra.mxu0 0
        %971 = vmatprep.subr.bf16.mxu0 0
        %972 = vmatpush1.bf16.msra.mxu0 0
        %973 = vmatprep.subr.bf16.mxu0 0
        %974 = vmatpush1.bf16.msra.mxu0 0
        %975 = vmatprep.subr.bf16.mxu0 0
        %976 = vmatpush1.bf16.msra.mxu0 0
        %977 = vmatprep.subr.bf16.mxu0 0
        %978 = vmatpush1.bf16.msra.mxu0 0
        %979 = vmatprep.subr.bf16.mxu0 0
        %980 = vmatpush1.bf16.msra.mxu0 0
        %981 = vmatprep.subr.bf16.mxu0 0
        %982 = vmatpush1.bf16.msra.mxu0 0
        %983 = vmatprep.subr.bf16.mxu0 0
        %984 = vmatpush1.bf16.msra.mxu0 0
        %985 = vmatprep.subr.bf16.mxu0 0
        %986 = vmatpush1.bf16.msra.mxu0 0
        %987 = vmatprep.subr.bf16.mxu0 0
        %988 = vmatpush1.bf16.msra.mxu0 0
        %989 = vmatprep.subr.bf16.mxu0 0
        %990 = vmatpush1.bf16.msra.mxu0 0
        %991 = vmatprep.subr.bf16.mxu0 0
        %992 = vmatpush1.bf16.msra.mxu0 0
        %993 = vmatprep.mubr.bf16.mxu0 0
        %994 = vmatmul.mubr.bf16.gmra.mrb[0].mxu0 %v373
        %v995 = vpop.f32.mrb[0].mxu0
        %v996 = vadd.f32 0.0, %v995
        %v997 = vpop.f32.mrb[0].mxu0
        %v998 = vadd.f32 0.0, %v997
        %v999 = vpop.f32.mrb[0].mxu0
        %v1000 = vadd.f32 0.0, %v999
        %v1001 = vpop.f32.mrb[0].mxu0
        %v1002 = vadd.f32 0.0, %v1001
        %1003 = vmatprep.mubr.bf16.mxu0 0
        %1004 = vmatmul.mubr.bf16.gmra.mrb[0].mxu0 %v376
        %v1005 = vpop.f32.mrb[0].mxu0
        %v1006 = vadd.f32 0.0, %v1005
        %v1007 = vpop.f32.mrb[0].mxu0
        %v1008 = vadd.f32 0.0, %v1007
        %v1009 = vpop.f32.mrb[0].mxu0
        %v1010 = vadd.f32 0.0, %v1009
        %v1011 = vpop.f32.mrb[0].mxu0
        %v1012 = vadd.f32 0.0, %v1011
        %1013 = vdwg.mxu0
        %1014 = vmatprep.subr.bf16.mxu0 %v332
        %1015 = vmatpush1.bf16.msra.mxu0 %v331
        %1016 = vmatprep.subr.bf16.mxu0 0
        %1017 = vmatpush1.bf16.msra.mxu0 0
        %1018 = vmatprep.subr.bf16.mxu0 0
        %1019 = vmatpush1.bf16.msra.mxu0 0
        %1020 = vmatprep.subr.bf16.mxu0 0
        %1021 = vmatpush1.bf16.msra.mxu0 0
        %1022 = vmatprep.subr.bf16.mxu0 0
        %1023 = vmatpush1.bf16.msra.mxu0 0
        %1024 = vmatprep.subr.bf16.mxu0 0
        %1025 = vmatpush1.bf16.msra.mxu0 0
        %1026 = vmatprep.subr.bf16.mxu0 0
        %1027 = vmatpush1.bf16.msra.mxu0 0
        %1028 = vmatprep.subr.bf16.mxu0 0
        %1029 = vmatpush1.bf16.msra.mxu0 0
        %1030 = vmatprep.subr.bf16.mxu0 0
        %1031 = vmatpush1.bf16.msra.mxu0 0
        %1032 = vmatprep.subr.bf16.mxu0 0
        %1033 = vmatpush1.bf16.msra.mxu0 0
        %1034 = vmatprep.subr.bf16.mxu0 0
        %1035 = vmatpush1.bf16.msra.mxu0 0
        %1036 = vmatprep.subr.bf16.mxu0 0
        %1037 = vmatpush1.bf16.msra.mxu0 0
        %1038 = vmatprep.subr.bf16.mxu0 0
        %1039 = vmatpush1.bf16.msra.mxu0 0
        %1040 = vmatprep.subr.bf16.mxu0 0
        %1041 = vmatpush1.bf16.msra.mxu0 0
        %1042 = vmatprep.subr.bf16.mxu0 0
        %1043 = vmatpush1.bf16.msra.mxu0 0
        %1044 = vmatprep.subr.bf16.mxu0 0
        %1045 = vmatpush1.bf16.msra.mxu0 0
        %1046 = vmatprep.mubr.bf16.mxu0 0
        %1047 = vmatmul.mubr.bf16.gmra.mrb[0].mxu0 %v373
        %v1048 = vpop.f32.mrb[0].mxu0
        %v1049 = vadd.f32 0.0, %v1048
        %v1050 = vpop.f32.mrb[0].mxu0
        %v1051 = vadd.f32 0.0, %v1050
        %v1052 = vpop.f32.mrb[0].mxu0
        %v1053 = vadd.f32 0.0, %v1052
        %v1054 = vpop.f32.mrb[0].mxu0
        %v1055 = vadd.f32 0.0, %v1054
        %1056 = vmatprep.mubr.bf16.mxu0 0
        %1057 = vmatmul.mubr.bf16.gmra.mrb[0].mxu0 %v376
        %v1058 = vpop.f32.mrb[0].mxu0
        %v1059 = vadd.f32 0.0, %v1058
        %v1060 = vpop.f32.mrb[0].mxu0
        %v1061 = vadd.f32 0.0, %v1060
        %v1062 = vpop.f32.mrb[0].mxu0
        %v1063 = vadd.f32 0.0, %v1062
        %v1064 = vpop.f32.mrb[0].mxu0
        %v1065 = vadd.f32 0.0, %v1064
        %1066 = vdwg.mxu0
        %1067 = vmatprep.subr.bf16.mxu0 %v334
        %1068 = vmatpush1.bf16.msra.mxu0 %v333
        %1069 = vmatprep.subr.bf16.mxu0 0
        %1070 = vmatpush1.bf16.msra.mxu0 0
        %1071 = vmatprep.subr.bf16.mxu0 0
        %1072 = vmatpush1.bf16.msra.mxu0 0
        %1073 = vmatprep.subr.bf16.mxu0 0
        %1074 = vmatpush1.bf16.msra.mxu0 0
        %1075 = vmatprep.subr.bf16.mxu0 0
        %1076 = vmatpush1.bf16.msra.mxu0 0
        %1077 = vmatprep.subr.bf16.mxu0 0
        %1078 = vmatpush1.bf16.msra.mxu0 0
        %1079 = vmatprep.subr.bf16.mxu0 0
        %1080 = vmatpush1.bf16.msra.mxu0 0
        %1081 = vmatprep.subr.bf16.mxu0 0
        %1082 = vmatpush1.bf16.msra.mxu0 0
        %1083 = vmatprep.subr.bf16.mxu0 0
        %1084 = vmatpush1.bf16.msra.mxu0 0
        %1085 = vmatprep.subr.bf16.mxu0 0
        %1086 = vmatpush1.bf16.msra.mxu0 0
        %1087 = vmatprep.subr.bf16.mxu0 0
        %1088 = vmatpush1.bf16.msra.mxu0 0
        %1089 = vmatprep.subr.bf16.mxu0 0
        %1090 = vmatpush1.bf16.msra.mxu0 0
        %1091 = vmatprep.subr.bf16.mxu0 0
        %1092 = vmatpush1.bf16.msra.mxu0 0
        %1093 = vmatprep.subr.bf16.mxu0 0
        %1094 = vmatpush1.bf16.msra.mxu0 0
        %1095 = vmatprep.subr.bf16.mxu0 0
        %1096 = vmatpush1.bf16.msra.mxu0 0
        %1097 = vmatprep.subr.bf16.mxu0 0
        %1098 = vmatpush1.bf16.msra.mxu0 0
        %1099 = vmatprep.mubr.bf16.mxu0 0
        %1100 = vmatmul.mubr.bf16.gmra.mrb[0].mxu0 %v373
        %v1101 = vpop.f32.mrb[0].mxu0
        %v1102 = vadd.f32 0.0, %v1101
        %v1103 = vpop.f32.mrb[0].mxu0
        %v1104 = vadd.f32 0.0, %v1103
        %v1105 = vpop.f32.mrb[0].mxu0
        %v1106 = vadd.f32 0.0, %v1105
        %v1107 = vpop.f32.mrb[0].mxu0
        %v1108 = vadd.f32 0.0, %v1107
        %1109 = vmatprep.mubr.bf16.mxu0 0
        %1110 = vmatmul.mubr.bf16.gmra.mrb[0].mxu0 %v376
        %v1111 = vpop.f32.mrb[0].mxu0
        %v1112 = vadd.f32 0.0, %v1111
        %v1113 = vpop.f32.mrb[0].mxu0
        %v1114 = vadd.f32 0.0, %v1113
        %v1115 = vpop.f32.mrb[0].mxu0
        %v1116 = vadd.f32 0.0, %v1115
        %v1117 = vpop.f32.mrb[0].mxu0
        %v1118 = vadd.f32 0.0, %v1117
        %1119 = vdwg.mxu0
        %1120 = vmatprep.subr.bf16.mxu0 %v336
        %1121 = vmatpush1.bf16.msra.mxu0 %v335
        %1122 = vmatprep.subr.bf16.mxu0 0
        %1123 = vmatpush1.bf16.msra.mxu0 0
        %1124 = vmatprep.subr.bf16.mxu0 0
        %1125 = vmatpush1.bf16.msra.mxu0 0
        %1126 = vmatprep.subr.bf16.mxu0 0
        %1127 = vmatpush1.bf16.msra.mxu0 0
        %1128 = vmatprep.subr.bf16.mxu0 0
        %1129 = vmatpush1.bf16.msra.mxu0 0
        %1130 = vmatprep.subr.bf16.mxu0 0
        %1131 = vmatpush1.bf16.msra.mxu0 0
        %1132 = vmatprep.subr.bf16.mxu0 0
        %1133 = vmatpush1.bf16.msra.mxu0 0
        %1134 = vmatprep.subr.bf16.mxu0 0
        %1135 = vmatpush1.bf16.msra.mxu0 0
        %1136 = vmatprep.subr.bf16.mxu0 0
        %1137 = vmatpush1.bf16.msra.mxu0 0
        %1138 = vmatprep.subr.bf16.mxu0 0
        %1139 = vmatpush1.bf16.msra.mxu0 0
        %1140 = vmatprep.subr.bf16.mxu0 0
        %1141 = vmatpush1.bf16.msra.mxu0 0
        %1142 = vmatprep.subr.bf16.mxu0 0
        %1143 = vmatpush1.bf16.msra.mxu0 0
        %1144 = vmatprep.subr.bf16.mxu0 0
        %1145 = vmatpush1.bf16.msra.mxu0 0
        %1146 = vmatprep.subr.bf16.mxu0 0
        %1147 = vmatpush1.bf16.msra.mxu0 0
        %1148 = vmatprep.subr.bf16.mxu0 0
        %1149 = vmatpush1.bf16.msra.mxu0 0
        %1150 = vmatprep.subr.bf16.mxu0 0
        %1151 = vmatpush1.bf16.msra.mxu0 0
        %1152 = vmatprep.mubr.bf16.mxu0 0
        %1153 = vmatmul.mubr.bf16.gmra.mrb[0].mxu0 %v373
        %v1154 = vpop.f32.mrb[0].mxu0
        %v1155 = vadd.f32 0.0, %v1154
        %v1156 = vpop.f32.mrb[0].mxu0
        %v1157 = vadd.f32 0.0, %v1156
        %v1158 = vpop.f32.mrb[0].mxu0
        %v1159 = vadd.f32 0.0, %v1158
        %v1160 = vpop.f32.mrb[0].mxu0
        %v1161 = vadd.f32 0.0, %v1160
        %1162 = vmatprep.mubr.bf16.mxu0 0
        %1163 = vmatmul.mubr.bf16.gmra.mrb[0].mxu0 %v376
        %v1164 = vpop.f32.mrb[0].mxu0
        %v1165 = vadd.f32 0.0, %v1164
        %v1166 = vpop.f32.mrb[0].mxu0
        %v1167 = vadd.f32 0.0, %v1166
        %v1168 = vpop.f32.mrb[0].mxu0
        %v1169 = vadd.f32 0.0, %v1168
        %v1170 = vpop.f32.mrb[0].mxu0
        %v1171 = vadd.f32 0.0, %v1170
        %1172 = vdwg.mxu0
        %1173 = vmatprep.subr.bf16.mxu0 %v338
        %1174 = vmatpush1.bf16.msra.mxu0 %v337
        %1175 = vmatprep.subr.bf16.mxu0 0
        %1176 = vmatpush1.bf16.msra.mxu0 0
        %1177 = vmatprep.subr.bf16.mxu0 0
        %1178 = vmatpush1.bf16.msra.mxu0 0
        %1179 = vmatprep.subr.bf16.mxu0 0
        %1180 = vmatpush1.bf16.msra.mxu0 0
        %1181 = vmatprep.subr.bf16.mxu0 0
        %1182 = vmatpush1.bf16.msra.mxu0 0
        %1183 = vmatprep.subr.bf16.mxu0 0
        %1184 = vmatpush1.bf16.msra.mxu0 0
        %1185 = vmatprep.subr.bf16.mxu0 0
        %1186 = vmatpush1.bf16.msra.mxu0 0
        %1187 = vmatprep.subr.bf16.mxu0 0
        %1188 = vmatpush1.bf16.msra.mxu0 0
        %1189 = vmatprep.subr.bf16.mxu0 0
        %1190 = vmatpush1.bf16.msra.mxu0 0
        %1191 = vmatprep.subr.bf16.mxu0 0
        %1192 = vmatpush1.bf16.msra.mxu0 0
        %1193 = vmatprep.subr.bf16.mxu0 0
        %1194 = vmatpush1.bf16.msra.mxu0 0
        %1195 = vmatprep.subr.bf16.mxu0 0
        %1196 = vmatpush1.bf16.msra.mxu0 0
        %1197 = vmatprep.subr.bf16.mxu0 0
        %1198 = vmatpush1.bf16.msra.mxu0 0
        %1199 = vmatprep.subr.bf16.mxu0 0
        %1200 = vmatpush1.bf16.msra.mxu0 0
        %1201 = vmatprep.subr.bf16.mxu0 0
        %1202 = vmatpush1.bf16.msra.mxu0 0
        %1203 = vmatprep.subr.bf16.mxu0 0
        %1204 = vmatpush1.bf16.msra.mxu0 0
        %1205 = vmatprep.mubr.bf16.mxu0 0
        %1206 = vmatmul.mubr.bf16.gmra.mrb[0].mxu0 %v373
        %v1207 = vpop.f32.mrb[0].mxu0
        %v1208 = vadd.f32 0.0, %v1207
        %v1209 = vpop.f32.mrb[0].mxu0
        %v1210 = vadd.f32 0.0, %v1209
        %v1211 = vpop.f32.mrb[0].mxu0
        %v1212 = vadd.f32 0.0, %v1211
        %v1213 = vpop.f32.mrb[0].mxu0
        %v1214 = vadd.f32 0.0, %v1213
        %1215 = vmatprep.mubr.bf16.mxu0 0
        %1216 = vmatmul.mubr.bf16.gmra.mrb[0].mxu0 %v376
        %v1217 = vpop.f32.mrb[0].mxu0
        %v1218 = vadd.f32 0.0, %v1217
        %v1219 = vpop.f32.mrb[0].mxu0
        %v1220 = vadd.f32 0.0, %v1219
        %v1221 = vpop.f32.mrb[0].mxu0
        %v1222 = vadd.f32 0.0, %v1221
        %v1223 = vpop.f32.mrb[0].mxu0
        %v1224 = vadd.f32 0.0, %v1223
        %1225 = vdwg.mxu0
        %v1226 = vpack.c.bf16 %v417, %v413
        %v1227 = vpack.c.bf16 %v419, %v415
        %v1228 = vpack.c.bf16 %v470, %v466
        %v1229 = vpack.c.bf16 %v472, %v468
        %v1230 = vpack.c.bf16 %v523, %v519
        %v1231 = vpack.c.bf16 %v525, %v521
        %v1232 = vpack.c.bf16 %v576, %v572
        %v1233 = vpack.c.bf16 %v578, %v574
        %v1234 = vpack.c.bf16 %v629, %v625
        %v1235 = vpack.c.bf16 %v631, %v627
        %v1236 = vpack.c.bf16 %v682, %v678
        %v1237 = vpack.c.bf16 %v684, %v680
        %v1238 = vpack.c.bf16 %v735, %v731
        %v1239 = vpack.c.bf16 %v737, %v733
        %v1240 = vpack.c.bf16 %v788, %v784
        %v1241 = vpack.c.bf16 %v790, %v786
        %v1242 = vpack.c.bf16 %v841, %v837
        %v1243 = vpack.c.bf16 %v843, %v839
        %v1244 = vpack.c.bf16 %v894, %v890
        %v1245 = vpack.c.bf16 %v896, %v892
        %v1246 = vpack.c.bf16 %v947, %v943
        %v1247 = vpack.c.bf16 %v949, %v945
        %v1248 = vpack.c.bf16 %v1000, %v996
        %v1249 = vpack.c.bf16 %v1002, %v998
        %v1250 = vpack.c.bf16 %v1053, %v1049
        %v1251 = vpack.c.bf16 %v1055, %v1051
        %v1252 = vpack.c.bf16 %v1106, %v1102
        %v1253 = vpack.c.bf16 %v1108, %v1104
        %v1254 = vpack.c.bf16 %v1159, %v1155
        %v1255 = vpack.c.bf16 %v1161, %v1157
        %v1256 = vpack.c.bf16 %v1212, %v1208
        %v1257 = vpack.c.bf16 %v1214, %v1210
        %v1258 = vpack.c.bf16 %v427, %v423
        %v1259 = vpack.c.bf16 %v429, %v425
        %v1260 = vpack.c.bf16 %v480, %v476
        %v1261 = vpack.c.bf16 %v482, %v478
        %v1262 = vpack.c.bf16 %v533, %v529
        %v1263 = vpack.c.bf16 %v535, %v531
        %v1264 = vpack.c.bf16 %v586, %v582
        %v1265 = vpack.c.bf16 %v588, %v584
        %v1266 = vpack.c.bf16 %v639, %v635
        %v1267 = vpack.c.bf16 %v641, %v637
        %v1268 = vpack.c.bf16 %v692, %v688
        %v1269 = vpack.c.bf16 %v694, %v690
        %v1270 = vpack.c.bf16 %v745, %v741
        %v1271 = vpack.c.bf16 %v747, %v743
        %v1272 = vpack.c.bf16 %v798, %v794
        %v1273 = vpack.c.bf16 %v800, %v796
        %v1274 = vpack.c.bf16 %v851, %v847
        %v1275 = vpack.c.bf16 %v853, %v849
        %v1276 = vpack.c.bf16 %v904, %v900
        %v1277 = vpack.c.bf16 %v906, %v902
        %v1278 = vpack.c.bf16 %v957, %v953
        %v1279 = vpack.c.bf16 %v959, %v955
        %v1280 = vpack.c.bf16 %v1010, %v1006
        %v1281 = vpack.c.bf16 %v1012, %v1008
        %v1282 = vpack.c.bf16 %v1063, %v1059
        %v1283 = vpack.c.bf16 %v1065, %v1061
        %v1284 = vpack.c.bf16 %v1116, %v1112
        %v1285 = vpack.c.bf16 %v1118, %v1114
        %v1286 = vpack.c.bf16 %v1169, %v1165
        %v1287 = vpack.c.bf16 %v1171, %v1167
        %v1288 = vpack.c.bf16 %v1222, %v1218
        %v1289 = vpack.c.bf16 %v1224, %v1220
        %v1354 = vunpack.c.l.b16 %v1226
        %v1355 = vunpack.c.l.b16 %v1227
        %v1356 = vunpack.c.l.b16 %v1228
        %v1357 = vunpack.c.l.b16 %v1229
        %v1358 = vunpack.c.l.b16 %v1230
        %v1359 = vunpack.c.l.b16 %v1231
        %v1360 = vunpack.c.l.b16 %v1232
        %v1361 = vunpack.c.l.b16 %v1233
        %v1362 = vunpack.c.l.b16 %v1234
        %v1363 = vunpack.c.l.b16 %v1235
        %v1364 = vunpack.c.l.b16 %v1236
        %v1365 = vunpack.c.l.b16 %v1237
        %v1366 = vunpack.c.l.b16 %v1238
        %v1367 = vunpack.c.l.b16 %v1239
        %v1368 = vunpack.c.l.b16 %v1240
        %v1369 = vunpack.c.l.b16 %v1241
        %v1370 = vunpack.c.l.b16 %v1242
        %v1371 = vunpack.c.l.b16 %v1243
        %v1372 = vunpack.c.l.b16 %v1244
        %v1373 = vunpack.c.l.b16 %v1245
        %v1374 = vunpack.c.l.b16 %v1246
        %v1375 = vunpack.c.l.b16 %v1247
        %v1376 = vunpack.c.l.b16 %v1248
        %v1377 = vunpack.c.l.b16 %v1249
        %v1378 = vunpack.c.l.b16 %v1250
        %v1379 = vunpack.c.l.b16 %v1251
        %v1380 = vunpack.c.l.b16 %v1252
        %v1381 = vunpack.c.l.b16 %v1253
        %v1382 = vunpack.c.l.b16 %v1254
        %v1383 = vunpack.c.l.b16 %v1255
        %v1384 = vunpack.c.l.b16 %v1256
        %v1385 = vunpack.c.l.b16 %v1257
        %v1386 = vunpack.c.h.b16 %v1226
        %v1387 = vunpack.c.h.b16 %v1227
        %v1388 = vunpack.c.h.b16 %v1228
        %v1389 = vunpack.c.h.b16 %v1229
        %v1390 = vunpack.c.h.b16 %v1230
        %v1391 = vunpack.c.h.b16 %v1231
        %v1392 = vunpack.c.h.b16 %v1232
        %v1393 = vunpack.c.h.b16 %v1233
        %v1394 = vunpack.c.h.b16 %v1234
        %v1395 = vunpack.c.h.b16 %v1235
        %v1396 = vunpack.c.h.b16 %v1236
        %v1397 = vunpack.c.h.b16 %v1237
        %v1398 = vunpack.c.h.b16 %v1238
        %v1399 = vunpack.c.h.b16 %v1239
        %v1400 = vunpack.c.h.b16 %v1240
        %v1401 = vunpack.c.h.b16 %v1241
        %v1402 = vunpack.c.h.b16 %v1242
        %v1403 = vunpack.c.h.b16 %v1243
        %v1404 = vunpack.c.h.b16 %v1244
        %v1405 = vunpack.c.h.b16 %v1245
        %v1406 = vunpack.c.h.b16 %v1246
        %v1407 = vunpack.c.h.b16 %v1247
        %v1408 = vunpack.c.h.b16 %v1248
        %v1409 = vunpack.c.h.b16 %v1249
        %v1410 = vunpack.c.h.b16 %v1250
        %v1411 = vunpack.c.h.b16 %v1251
        %v1412 = vunpack.c.h.b16 %v1252
        %v1413 = vunpack.c.h.b16 %v1253
        %v1414 = vunpack.c.h.b16 %v1254
        %v1415 = vunpack.c.h.b16 %v1255
        %v1416 = vunpack.c.h.b16 %v1256
        %v1417 = vunpack.c.h.b16 %v1257
        %v1418 = vunpack.c.l.b16 %v1258
        %v1419 = vunpack.c.l.b16 %v1259
        %v1420 = vunpack.c.l.b16 %v1260
        %v1421 = vunpack.c.l.b16 %v1261
        %v1422 = vunpack.c.l.b16 %v1262
        %v1423 = vunpack.c.l.b16 %v1263
        %v1424 = vunpack.c.l.b16 %v1264
        %v1425 = vunpack.c.l.b16 %v1265
        %v1426 = vunpack.c.l.b16 %v1266
        %v1427 = vunpack.c.l.b16 %v1267
        %v1428 = vunpack.c.l.b16 %v1268
        %v1429 = vunpack.c.l.b16 %v1269
        %v1430 = vunpack.c.l.b16 %v1270
        %v1431 = vunpack.c.l.b16 %v1271
        %v1432 = vunpack.c.l.b16 %v1272
        %v1433 = vunpack.c.l.b16 %v1273
        %v1434 = vunpack.c.l.b16 %v1274
        %v1435 = vunpack.c.l.b16 %v1275
        %v1436 = vunpack.c.l.b16 %v1276
        %v1437 = vunpack.c.l.b16 %v1277
        %v1438 = vunpack.c.l.b16 %v1278
        %v1439 = vunpack.c.l.b16 %v1279
        %v1440 = vunpack.c.l.b16 %v1280
        %v1441 = vunpack.c.l.b16 %v1281
        %v1442 = vunpack.c.l.b16 %v1282
        %v1443 = vunpack.c.l.b16 %v1283
        %v1444 = vunpack.c.l.b16 %v1284
        %v1445 = vunpack.c.l.b16 %v1285
        %v1446 = vunpack.c.l.b16 %v1286
        %v1447 = vunpack.c.l.b16 %v1287
        %v1448 = vunpack.c.l.b16 %v1288
        %v1449 = vunpack.c.l.b16 %v1289
        %v1450 = vunpack.c.h.b16 %v1258
        %v1451 = vunpack.c.h.b16 %v1259
        %v1452 = vunpack.c.h.b16 %v1260
        %v1453 = vunpack.c.h.b16 %v1261
        %v1454 = vunpack.c.h.b16 %v1262
        %v1455 = vunpack.c.h.b16 %v1263
        %v1456 = vunpack.c.h.b16 %v1264
        %v1457 = vunpack.c.h.b16 %v1265
        %v1458 = vunpack.c.h.b16 %v1266
        %v1459 = vunpack.c.h.b16 %v1267
        %v1460 = vunpack.c.h.b16 %v1268
        %v1461 = vunpack.c.h.b16 %v1269
        %v1462 = vunpack.c.h.b16 %v1270
        %v1463 = vunpack.c.h.b16 %v1271
        %v1464 = vunpack.c.h.b16 %v1272
        %v1465 = vunpack.c.h.b16 %v1273
        %v1466 = vunpack.c.h.b16 %v1274
        %v1467 = vunpack.c.h.b16 %v1275
        %v1468 = vunpack.c.h.b16 %v1276
        %v1469 = vunpack.c.h.b16 %v1277
        %v1470 = vunpack.c.h.b16 %v1278
        %v1471 = vunpack.c.h.b16 %v1279
        %v1472 = vunpack.c.h.b16 %v1280
        %v1473 = vunpack.c.h.b16 %v1281
        %v1474 = vunpack.c.h.b16 %v1282
        %v1475 = vunpack.c.h.b16 %v1283
        %v1476 = vunpack.c.h.b16 %v1284
        %v1477 = vunpack.c.h.b16 %v1285
        %v1478 = vunpack.c.h.b16 %v1286
        %v1479 = vunpack.c.h.b16 %v1287
        %v1480 = vunpack.c.h.b16 %v1288
        %v1481 = vunpack.c.h.b16 %v1289
        %v1482 = vpack.c.b16 %v1355, %v1354
        %v1483 = vpack.c.b16 %v1357, %v1356
        %v1484 = vpack.c.b16 %v1359, %v1358
        %v1485 = vpack.c.b16 %v1361, %v1360
        %v1486 = vpack.c.b16 %v1363, %v1362
        %v1487 = vpack.c.b16 %v1365, %v1364
        %v1488 = vpack.c.b16 %v1367, %v1366
        %v1489 = vpack.c.b16 %v1369, %v1368
        %v1490 = vpack.c.b16 %v1371, %v1370
        %v1491 = vpack.c.b16 %v1373, %v1372
        %v1492 = vpack.c.b16 %v1375, %v1374
        %v1493 = vpack.c.b16 %v1377, %v1376
        %v1494 = vpack.c.b16 %v1379, %v1378
        %v1495 = vpack.c.b16 %v1381, %v1380
        %v1496 = vpack.c.b16 %v1383, %v1382
        %v1497 = vpack.c.b16 %v1385, %v1384
        %v1498 = vpack.c.b16 %v1387, %v1386
        %v1499 = vpack.c.b16 %v1389, %v1388
        %v1500 = vpack.c.b16 %v1391, %v1390
        %v1501 = vpack.c.b16 %v1393, %v1392
        %v1502 = vpack.c.b16 %v1395, %v1394
        %v1503 = vpack.c.b16 %v1397, %v1396
        %v1504 = vpack.c.b16 %v1399, %v1398
        %v1505 = vpack.c.b16 %v1401, %v1400
        %v1506 = vpack.c.b16 %v1403, %v1402
        %v1507 = vpack.c.b16 %v1405, %v1404
        %v1508 = vpack.c.b16 %v1407, %v1406
        %v1509 = vpack.c.b16 %v1409, %v1408
        %v1510 = vpack.c.b16 %v1411, %v1410
        %v1511 = vpack.c.b16 %v1413, %v1412
        %v1512 = vpack.c.b16 %v1415, %v1414
        %v1513 = vpack.c.b16 %v1417, %v1416
        %v1514 = vpack.c.b16 %v1419, %v1418
        %v1515 = vpack.c.b16 %v1421, %v1420
        %v1516 = vpack.c.b16 %v1423, %v1422
        %v1517 = vpack.c.b16 %v1425, %v1424
        %v1518 = vpack.c.b16 %v1427, %v1426
        %v1519 = vpack.c.b16 %v1429, %v1428
        %v1520 = vpack.c.b16 %v1431, %v1430
        %v1521 = vpack.c.b16 %v1433, %v1432
        %v1522 = vpack.c.b16 %v1435, %v1434
        %v1523 = vpack.c.b16 %v1437, %v1436
        %v1524 = vpack.c.b16 %v1439, %v1438
        %v1525 = vpack.c.b16 %v1441, %v1440
        %v1526 = vpack.c.b16 %v1443, %v1442
        %v1527 = vpack.c.b16 %v1445, %v1444
        %v1528 = vpack.c.b16 %v1447, %v1446
        %v1529 = vpack.c.b16 %v1449, %v1448
        %v1530 = vpack.c.b16 %v1451, %v1450
        %v1531 = vpack.c.b16 %v1453, %v1452
        %v1532 = vpack.c.b16 %v1455, %v1454
        %v1533 = vpack.c.b16 %v1457, %v1456
        %v1534 = vpack.c.b16 %v1459, %v1458
        %v1535 = vpack.c.b16 %v1461, %v1460
        %v1536 = vpack.c.b16 %v1463, %v1462
        %v1537 = vpack.c.b16 %v1465, %v1464
        %v1538 = vpack.c.b16 %v1467, %v1466
        %v1539 = vpack.c.b16 %v1469, %v1468
        %v1540 = vpack.c.b16 %v1471, %v1470
        %v1541 = vpack.c.b16 %v1473, %v1472
        %v1542 = vpack.c.b16 %v1475, %v1474
        %v1543 = vpack.c.b16 %v1477, %v1476
        %v1544 = vpack.c.b16 %v1479, %v1478
        %v1545 = vpack.c.b16 %v1481, %v1480
        %vm1546 = vcmask 1040384
        %vm1547 = vcmask 1044484
        %vm1548 = vmor %vm1546, %vm1547
        %v1549 = vrot.slane %v1482, 7
        %v1550 = vrot.slane %v1483, 7
        %v1551 = vrot.slane %v1484, 7
        %v1552 = vrot.slane %v1485, 7
        %v1553 = vrot.slane %v1486, 7
        %v1554 = vrot.slane %v1487, 7
        %v1555 = vrot.slane %v1488, 7
        %v1556 = vrot.slane %v1489, 7
        %v1557 = vrot.slane %v1490, 7
        %v1558 = vrot.slane %v1491, 7
        %v1559 = vrot.slane %v1492, 7
        %v1560 = vrot.slane %v1493, 7
        %v1561 = vrot.slane %v1494, 7
        %v1562 = vrot.slane %v1495, 7
        %v1563 = vrot.slane %v1496, 7
        %v1564 = vrot.slane %v1497, 7
        %v1565 = vrot.slane %v1549, 4
        %v1566 = vrot.slane %v1498, 7
        %v1567 = vsel %vm1548, %v1565, %v1566
        %v1568 = vrot.slane %v1550, 4
        %v1569 = vrot.slane %v1499, 7
        %v1570 = vsel %vm1548, %v1568, %v1569
        %v1571 = vrot.slane %v1551, 4
        %v1572 = vrot.slane %v1500, 7
        %v1573 = vsel %vm1548, %v1571, %v1572
        %v1574 = vrot.slane %v1552, 4
        %v1575 = vrot.slane %v1501, 7
        %v1576 = vsel %vm1548, %v1574, %v1575
        %v1577 = vrot.slane %v1553, 4
        %v1578 = vrot.slane %v1502, 7
        %v1579 = vsel %vm1548, %v1577, %v1578
        %v1580 = vrot.slane %v1554, 4
        %v1581 = vrot.slane %v1503, 7
        %v1582 = vsel %vm1548, %v1580, %v1581
        %v1583 = vrot.slane %v1555, 4
        %v1584 = vrot.slane %v1504, 7
        %v1585 = vsel %vm1548, %v1583, %v1584
        %v1586 = vrot.slane %v1556, 4
        %v1587 = vrot.slane %v1505, 7
        %v1588 = vsel %vm1548, %v1586, %v1587
        %v1589 = vrot.slane %v1557, 4
        %v1590 = vrot.slane %v1506, 7
        %v1591 = vsel %vm1548, %v1589, %v1590
        %v1592 = vrot.slane %v1558, 4
        %v1593 = vrot.slane %v1507, 7
        %v1594 = vsel %vm1548, %v1592, %v1593
        %v1595 = vrot.slane %v1559, 4
        %v1596 = vrot.slane %v1508, 7
        %v1597 = vsel %vm1548, %v1595, %v1596
        %v1598 = vrot.slane %v1560, 4
        %v1599 = vrot.slane %v1509, 7
        %v1600 = vsel %vm1548, %v1598, %v1599
        %v1601 = vrot.slane %v1561, 4
        %v1602 = vrot.slane %v1510, 7
        %v1603 = vsel %vm1548, %v1601, %v1602
        %v1604 = vrot.slane %v1562, 4
        %v1605 = vrot.slane %v1511, 7
        %v1606 = vsel %vm1548, %v1604, %v1605
        %v1607 = vrot.slane %v1563, 4
        %v1608 = vrot.slane %v1512, 7
        %v1609 = vsel %vm1548, %v1607, %v1608
        %v1610 = vrot.slane %v1564, 4
        %v1611 = vrot.slane %v1513, 7
        %v1612 = vsel %vm1548, %v1610, %v1611
        %v1613 = vrot.slane %v1566, 4
        %v1614 = vrot.slane %v1514, 7
        %v1615 = vsel %vm1548, %v1613, %v1614
        %v1616 = vrot.slane %v1569, 4
        %v1617 = vrot.slane %v1515, 7
        %v1618 = vsel %vm1548, %v1616, %v1617
        %v1619 = vrot.slane %v1572, 4
        %v1620 = vrot.slane %v1516, 7
        %v1621 = vsel %vm1548, %v1619, %v1620
        %v1622 = vrot.slane %v1575, 4
        %v1623 = vrot.slane %v1517, 7
        %v1624 = vsel %vm1548, %v1622, %v1623
        %v1625 = vrot.slane %v1578, 4
        %v1626 = vrot.slane %v1518, 7
        %v1627 = vsel %vm1548, %v1625, %v1626
        %v1628 = vrot.slane %v1581, 4
        %v1629 = vrot.slane %v1519, 7
        %v1630 = vsel %vm1548, %v1628, %v1629
        %v1631 = vrot.slane %v1584, 4
        %v1632 = vrot.slane %v1520, 7
        %v1633 = vsel %vm1548, %v1631, %v1632
        %v1634 = vrot.slane %v1587, 4
        %v1635 = vrot.slane %v1521, 7
        %v1636 = vsel %vm1548, %v1634, %v1635
        %v1637 = vrot.slane %v1590, 4
        %v1638 = vrot.slane %v1522, 7
        %v1639 = vsel %vm1548, %v1637, %v1638
        %v1640 = vrot.slane %v1593, 4
        %v1641 = vrot.slane %v1523, 7
        %v1642 = vsel %vm1548, %v1640, %v1641
        %v1643 = vrot.slane %v1596, 4
        %v1644 = vrot.slane %v1524, 7
        %v1645 = vsel %vm1548, %v1643, %v1644
        %v1646 = vrot.slane %v1599, 4
        %v1647 = vrot.slane %v1525, 7
        %v1648 = vsel %vm1548, %v1646, %v1647
        %v1649 = vrot.slane %v1602, 4
        %v1650 = vrot.slane %v1526, 7
        %v1651 = vsel %vm1548, %v1649, %v1650
        %v1652 = vrot.slane %v1605, 4
        %v1653 = vrot.slane %v1527, 7
        %v1654 = vsel %vm1548, %v1652, %v1653
        %v1655 = vrot.slane %v1608, 4
        %v1656 = vrot.slane %v1528, 7
        %v1657 = vsel %vm1548, %v1655, %v1656
        %v1658 = vrot.slane %v1611, 4
        %v1659 = vrot.slane %v1529, 7
        %v1660 = vsel %vm1548, %v1658, %v1659
        %v1661 = vrot.slane %v1614, 4
        %v1662 = vrot.slane %v1530, 7
        %v1663 = vsel %vm1548, %v1661, %v1662
        %v1664 = vrot.slane %v1617, 4
        %v1665 = vrot.slane %v1531, 7
        %v1666 = vsel %vm1548, %v1664, %v1665
        %v1667 = vrot.slane %v1620, 4
        %v1668 = vrot.slane %v1532, 7
        %v1669 = vsel %vm1548, %v1667, %v1668
        %v1670 = vrot.slane %v1623, 4
        %v1671 = vrot.slane %v1533, 7
        %v1672 = vsel %vm1548, %v1670, %v1671
        %v1673 = vrot.slane %v1626, 4
        %v1674 = vrot.slane %v1534, 7
        %v1675 = vsel %vm1548, %v1673, %v1674
        %v1676 = vrot.slane %v1629, 4
        %v1677 = vrot.slane %v1535, 7
        %v1678 = vsel %vm1548, %v1676, %v1677
        %v1679 = vrot.slane %v1632, 4
        %v1680 = vrot.slane %v1536, 7
        %v1681 = vsel %vm1548, %v1679, %v1680
        %v1682 = vrot.slane %v1635, 4
        %v1683 = vrot.slane %v1537, 7
        %v1684 = vsel %vm1548, %v1682, %v1683
        %v1685 = vrot.slane %v1638, 4
        %v1686 = vrot.slane %v1538, 7
        %v1687 = vsel %vm1548, %v1685, %v1686
        %v1688 = vrot.slane %v1641, 4
        %v1689 = vrot.slane %v1539, 7
        %v1690 = vsel %vm1548, %v1688, %v1689
        %v1691 = vrot.slane %v1644, 4
        %v1692 = vrot.slane %v1540, 7
        %v1693 = vsel %vm1548, %v1691, %v1692
        %v1694 = vrot.slane %v1647, 4
        %v1695 = vrot.slane %v1541, 7
        %v1696 = vsel %vm1548, %v1694, %v1695
        %v1697 = vrot.slane %v1650, 4
        %v1698 = vrot.slane %v1542, 7
        %v1699 = vsel %vm1548, %v1697, %v1698
        %v1700 = vrot.slane %v1653, 4
        %v1701 = vrot.slane %v1543, 7
        %v1702 = vsel %vm1548, %v1700, %v1701
        %v1703 = vrot.slane %v1656, 4
        %v1704 = vrot.slane %v1544, 7
        %v1705 = vsel %vm1548, %v1703, %v1704
        %v1706 = vrot.slane %v1659, 4
        %v1707 = vrot.slane %v1545, 7
        %v1708 = vsel %vm1548, %v1706, %v1707
        %v1709 = vrot.slane %v1662, 4
        %v1710 = vrot.slane %v1665, 4
        %v1711 = vrot.slane %v1668, 4
        %v1712 = vrot.slane %v1671, 4
        %v1713 = vrot.slane %v1674, 4
        %v1714 = vrot.slane %v1677, 4
        %v1715 = vrot.slane %v1680, 4
        %v1716 = vrot.slane %v1683, 4
        %v1717 = vrot.slane %v1686, 4
        %v1718 = vrot.slane %v1689, 4
        %v1719 = vrot.slane %v1692, 4
        %v1720 = vrot.slane %v1695, 4
        %v1721 = vrot.slane %v1698, 4
        %v1722 = vrot.slane %v1701, 4
        %v1723 = vrot.slane %v1704, 4
        %v1724 = vrot.slane %v1707, 4
        %1805 = vst [vmem:[%s163 + $0x4] sm:$0xee] %v1549
        %1806 = vst [vmem:[%s163 + $0xc] sm:$0xee] %v1550
        %1807 = vst [vmem:[%s163 + $0x14] sm:$0xee] %v1551
        %1808 = vst [vmem:[%s163 + $0x1c] sm:$0xee] %v1552
        %1809 = vst [vmem:[%s163 + $0x24] sm:$0xee] %v1553
        %1810 = vst [vmem:[%s163 + $0x2c] sm:$0xee] %v1554
        %1811 = vst [vmem:[%s163 + $0x34] sm:$0xee] %v1555
        %1812 = vst [vmem:[%s163 + $0x3c] sm:$0xee] %v1556
        %1813 = vst [vmem:[%s163 + $0x44] sm:$0xee] %v1557
        %1814 = vst [vmem:[%s163 + $0x4c] sm:$0xee] %v1558
        %1815 = vst [vmem:[%s163 + $0x54] sm:$0xee] %v1559
        %1816 = vst [vmem:[%s163 + $0x5c] sm:$0xee] %v1560
        %1817 = vst [vmem:[%s163 + $0x64] sm:$0xee] %v1561
        %1818 = vst [vmem:[%s163 + $0x6c] sm:$0xee] %v1562
        %1819 = vst [vmem:[%s163 + $0x74] sm:$0xee] %v1563
        %1820 = vst [vmem:[%s163 + $0x7c] sm:$0xee] %v1564
        %1821 = vst [vmem:[%s163 + $0x8c] sm:$0xff] %v1567
        %1822 = vst [vmem:[%s163 + $0x94] sm:$0xff] %v1570
        %1823 = vst [vmem:[%s163 + $0x9c] sm:$0xff] %v1573
        %1824 = vst [vmem:[%s163 + $0xa4] sm:$0xff] %v1576
        %1825 = vst [vmem:[%s163 + $0xac] sm:$0xff] %v1579
        %1826 = vst [vmem:[%s163 + $0xb4] sm:$0xff] %v1582
        %1827 = vst [vmem:[%s163 + $0xbc] sm:$0xff] %v1585
        %1828 = vst [vmem:[%s163 + $0xc4] sm:$0xff] %v1588
        %1829 = vst [vmem:[%s163 + $0xcc] sm:$0xff] %v1591
        %1830 = vst [vmem:[%s163 + $0xd4] sm:$0xff] %v1594
        %1831 = vst [vmem:[%s163 + $0xdc] sm:$0xff] %v1597
        %1832 = vst [vmem:[%s163 + $0xe4] sm:$0xff] %v1600
        %1833 = vst [vmem:[%s163 + $0xec] sm:$0xff] %v1603
        %1834 = vst [vmem:[%s163 + $0xf4] sm:$0xff] %v1606
        %1835 = vst [vmem:[%s163 + $0xfc] sm:$0xff] %v1609
        %1836 = vst [vmem:[%s163 + $0x104] sm:$0xff] %v1612
        %1837 = vst [vmem:[%s163 + $0x114] sm:$0xff] %v1615
        %1838 = vst [vmem:[%s163 + $0x11c] sm:$0xff] %v1618
        %1839 = vst [vmem:[%s163 + $0x124] sm:$0xff] %v1621
        %1840 = vst [vmem:[%s163 + $0x12c] sm:$0xff] %v1624
        %1841 = vst [vmem:[%s163 + $0x134] sm:$0xff] %v1627
        %1842 = vst [vmem:[%s163 + $0x13c] sm:$0xff] %v1630
        %1843 = vst [vmem:[%s163 + $0x144] sm:$0xff] %v1633
        %1844 = vst [vmem:[%s163 + $0x14c] sm:$0xff] %v1636
        %1845 = vst [vmem:[%s163 + $0x154] sm:$0xff] %v1639
        %1846 = vst [vmem:[%s163 + $0x15c] sm:$0xff] %v1642
        %1847 = vst [vmem:[%s163 + $0x164] sm:$0xff] %v1645
        %1848 = vst [vmem:[%s163 + $0x16c] sm:$0xff] %v1648
        %1849 = vst [vmem:[%s163 + $0x174] sm:$0xff] %v1651
        %1850 = vst [vmem:[%s163 + $0x17c] sm:$0xff] %v1654
        %1851 = vst [vmem:[%s163 + $0x184] sm:$0xff] %v1657
        %1852 = vst [vmem:[%s163 + $0x18c] sm:$0xff] %v1660
        %1853 = vst [vmem:[%s163 + $0x19c] sm:$0xff] %v1663
        %1854 = vst [vmem:[%s163 + $0x1a4] sm:$0xff] %v1666
        %1855 = vst [vmem:[%s163 + $0x1ac] sm:$0xff] %v1669
        %1856 = vst [vmem:[%s163 + $0x1b4] sm:$0xff] %v1672
        %1857 = vst [vmem:[%s163 + $0x1bc] sm:$0xff] %v1675
        %1858 = vst [vmem:[%s163 + $0x1c4] sm:$0xff] %v1678
        %1859 = vst [vmem:[%s163 + $0x1cc] sm:$0xff] %v1681
        %1860 = vst [vmem:[%s163 + $0x1d4] sm:$0xff] %v1684
        %1861 = vst [vmem:[%s163 + $0x1dc] sm:$0xff] %v1687
        %1862 = vst [vmem:[%s163 + $0x1e4] sm:$0xff] %v1690
        %1863 = vst [vmem:[%s163 + $0x1ec] sm:$0xff] %v1693
        %1864 = vst [vmem:[%s163 + $0x1f4] sm:$0xff] %v1696
        %1865 = vst [vmem:[%s163 + $0x1fc] sm:$0xff] %v1699
        %1866 = vst [vmem:[%s163 + $0x204] sm:$0xff] %v1702
        %1867 = vst [vmem:[%s163 + $0x20c] sm:$0xff] %v1705
        %1868 = vst [vmem:[%s163 + $0x214] sm:$0xff] %v1708
        %1869 = vst [vmem:[%s163 + $0x224] sm:$0x11] %v1709
        %1870 = vst [vmem:[%s163 + $0x22c] sm:$0x11] %v1710
        %1871 = vst [vmem:[%s163 + $0x234] sm:$0x11] %v1711
        %1872 = vst [vmem:[%s163 + $0x23c] sm:$0x11] %v1712
        %1873 = vst [vmem:[%s163 + $0x244] sm:$0x11] %v1713
        %1874 = vst [vmem:[%s163 + $0x24c] sm:$0x11] %v1714
        %1875 = vst [vmem:[%s163 + $0x254] sm:$0x11] %v1715
        %1876 = vst [vmem:[%s163 + $0x25c] sm:$0x11] %v1716
        %1877 = vst [vmem:[%s163 + $0x264] sm:$0x11] %v1717
        %1878 = vst [vmem:[%s163 + $0x26c] sm:$0x11] %v1718
        %1879 = vst [vmem:[%s163 + $0x274] sm:$0x11] %v1719
        %1880 = vst [vmem:[%s163 + $0x27c] sm:$0x11] %v1720
        %1881 = vst [vmem:[%s163 + $0x284] sm:$0x11] %v1721
        %1882 = vst [vmem:[%s163 + $0x28c] sm:$0x11] %v1722
        %1883 = vst [vmem:[%s163 + $0x294] sm:$0x11] %v1723
        %1884 = vst [vmem:[%s163 + $0x29c] sm:$0x11] %v1724
        %1885 = vst [vmem:[%s163] sm:$0x11] 0
        %1886 = vst [vmem:[%s163 + $0x8] sm:$0x11] 0
        %1887 = vst [vmem:[%s163 + $0x10] sm:$0x11] 0
        %1888 = vst [vmem:[%s163 + $0x18] sm:$0x11] 0
        %1889 = vst [vmem:[%s163 + $0x20] sm:$0x11] 0
        %1890 = vst [vmem:[%s163 + $0x28] sm:$0x11] 0
        %1891 = vst [vmem:[%s163 + $0x30] sm:$0x11] 0
        %1892 = vst [vmem:[%s163 + $0x38] sm:$0x11] 0
        %1893 = vst [vmem:[%s163 + $0x40] sm:$0x11] 0
        %1894 = vst [vmem:[%s163 + $0x48] sm:$0x11] 0
        %1895 = vst [vmem:[%s163 + $0x50] sm:$0x11] 0
        %1896 = vst [vmem:[%s163 + $0x58] sm:$0x11] 0
        %1897 = vst [vmem:[%s163 + $0x60] sm:$0x11] 0
        %1898 = vst [vmem:[%s163 + $0x68] sm:$0x11] 0
        %1899 = vst [vmem:[%s163 + $0x70] sm:$0x11] 0
        %1900 = vst [vmem:[%s163 + $0x78] sm:$0x11] 0
        %1901 = vst [vmem:[%s163 + $0x80] sm:$0x11] 0
        %1902 = vst [vmem:[%s163 + $0x220] sm:$0x22] 0
        %1903 = vst [vmem:[%s163 + $0x228] sm:$0x22] 0
        %1904 = vst [vmem:[%s163 + $0x230] sm:$0x22] 0
        %1905 = vst [vmem:[%s163 + $0x238] sm:$0x22] 0
        %1906 = vst [vmem:[%s163 + $0x240] sm:$0x22] 0
        %1907 = vst [vmem:[%s163 + $0x248] sm:$0x22] 0
        %1908 = vst [vmem:[%s163 + $0x250] sm:$0x22] 0
        %1909 = vst [vmem:[%s163 + $0x258] sm:$0x22] 0
        %1910 = vst [vmem:[%s163 + $0x260] sm:$0x22] 0
        %1911 = vst [vmem:[%s163 + $0x268] sm:$0x22] 0
        %1912 = vst [vmem:[%s163 + $0x270] sm:$0x22] 0
        %1913 = vst [vmem:[%s163 + $0x278] sm:$0x22] 0
        %1914 = vst [vmem:[%s163 + $0x280] sm:$0x22] 0
        %1915 = vst [vmem:[%s163 + $0x288] sm:$0x22] 0
        %1916 = vst [vmem:[%s163 + $0x290] sm:$0x22] 0
        %1917 = vst [vmem:[%s163 + $0x298] sm:$0x22] 0
        %1918 = vst [vmem:[%s163 + $0x2a0] sm:$0x22] 0
        %1919 = vst [vmem:[%s163] sm:$0xe] 0
        %1920 = vst [vmem:[%s163 + $0x88] sm:$0xf] 0
        %1921 = vst [vmem:[%s163 + $0x110] sm:$0xf] 0
        %1922 = vst [vmem:[%s163 + $0x198] sm:$0xf] 0
        %1923 = vst [vmem:[%s163 + $0x220] sm:$0x1] 0
        %1924 = vst [vmem:[%s163 + $0x84] sm:$0xe] 0
        %1925 = vst [vmem:[%s163 + $0x10c] sm:$0xf] 0
        %1926 = vst [vmem:[%s163 + $0x194] sm:$0xf] 0
        %1927 = vst [vmem:[%s163 + $0x21c] sm:$0xf] 0
        %1928 = vst [vmem:[%s163 + $0x2a4] sm:$0x1] 0
        %p1929 = scmp.lt.s32.totalorder %s16, 1
        %s1930 = scalar_select %p1929, %s16, 1
        %s1931 = smul.addr %s1930, 170
        %s1932 = smul.addr %s1931, 4
        %s1933 = scalar_lea.vmem %s2, %s1932
        // Predicated region
        $region33: #{tpu_custom_call.1} parent=27 // pred_check
          %p1934 = pneg %p81
        $region34: #{tpu_custom_call.1} parent=27 // pred_check_branch
          %1936 = sbr.rel (%p1934) target = $region36
        $region35: #{tpu_custom_call.1} parent=27 // pred_region
          _
        $region36: #{tpu_custom_call.1} parent=27 // pred_fallthru
          _
      $region28: #{tpu_custom_call.1} parent=5 // pred_fallthru
        _
      %p1937 = scmp.le.s32.totalorder 2, %s11
      // Predicated region
      $region37: #{tpu_custom_call.1} parent=5 // pred_check
        %p1938 = pneg %p1937
      $region38: #{tpu_custom_call.1} parent=5 // pred_check_branch
        %1940 = sbr.rel (%p1938) target = $region40
      $region39: #{tpu_custom_call.1} parent=5 // pred_region
        %s1941 = ssub.s32 %s11, 2
        // Predicated region
        $region41: #{tpu_custom_call.1} parent=39 // pred_check
          %p1942 = pneg %p87
        $region42: #{tpu_custom_call.1} parent=39 // pred_check_branch
          %1944 = sbr.rel (%p1942) target = $region44
        $region43: #{tpu_custom_call.1} parent=39 // pred_region
          %p1945 = scmp.lt.s32.totalorder %s17, 1
          %s1946 = scalar_select %p1945, %s17, 1
          %s1947 = smul.addr %s1946, 170
          %s1948 = smul.addr %s1947, 4
          %s1949 = scalar_lea.vmem %s2, %s1948
        $region44: #{tpu_custom_call.1} parent=39 // pred_fallthru
          _
      $region40: #{tpu_custom_call.1} parent=5 // pred_fallthru
        _
    $region6: #{tpu_custom_call.1} parent=1 // loop_footer
      %s15 = sadd.s32 1, %s11
    $region7: #{tpu_custom_call.1} parent=1 // loop_footer_branch
      %10 = sbr.rel target = $region3
    $region8: #{tpu_custom_call.1} parent=1 // loop_exit
      _
    %1950 = vsyncpa [#allocation3], 1
    %s1951 = scalar_lea.sflag [#allocation3], 1
    %1952 = vsyncpa %s1951, 1

</llo_original>
